<compile_context>
chip_gen: v5e
topology: v5e:2x2
jax: 0.10.0
libtpu: 0.0.40
codegen_flags: <defaults>
</compile_context>

<pallas_src>
import functools

import jax
import jax.numpy as jnp
from jax.experimental import pallas as pl
from jax.experimental.pallas import tpu as pltpu


def _round_up(x, m):
    return ((x + m - 1) // m) * m


def _double_conv_kernel(xp_ref, w1b_ref, b1_ref, w2b_ref, b2_ref, mask_ref,
                        o_ref, p_ref, mid_ref, *, Wp):
    # xp_ref  : (Cin_p, Lp_pad)        bf16 zero-padded input plane (flat)
    # w1b_ref : (3, Cout_p, 3*Cin_p)   bf16 conv1 weights, per-dy bands
    # b1_ref  : (Cout_p, 1)            f32
    # w2b_ref : (3, Cout_p, 3*Cout_p)  bf16 conv2 weights, per-dy bands
    # b2_ref  : (Cout_p, 1)            f32
    # mask_ref: (1, M_pad)             f32; 1.0 on valid output columns
    # o_ref   : (Cout_p, M_pad)        f32 output in padded-width coords
    # p_ref   : (2, 3*Cmax, M_pad)     bf16 double-buffered im2col band scratch
    # mid_ref : (Cout_p, Lmid_pad)     bf16 re-padded intermediate activation
    cout, m_pad = o_ref.shape
    cin = xp_ref.shape[0]
    lmid = mid_ref.shape[1]
    f32 = jnp.float32

    # ---------------- conv1: 3 dy-band partial matmuls (K = 3*Cin_p) --------
    acc1 = jnp.zeros((cout, m_pad), f32)
    for dy in range(3):
        buf = dy % 2
        for dx in range(3):
            off = dy * Wp + dx                       # static python int
            p_ref[buf, dx * cin:(dx + 1) * cin, :] = xp_ref[:, off:off + m_pad]
        acc1 = acc1 + jnp.dot(w1b_ref[dy], p_ref[buf, 0:3 * cin, :],
                              preferred_element_type=f32)
    y1 = jnp.maximum(acc1 + b1_ref[...], 0.0)

    # ---- re-pad intermediate: zero halo, store lane-masked interior --------
    mid_ref[:, 0:Wp + 1] = jnp.zeros((cout, Wp + 1), mid_ref.dtype)
    mid_ref[:, Wp + 1 + m_pad:] = jnp.zeros(
        (cout, lmid - (Wp + 1 + m_pad)), mid_ref.dtype)
    mid_ref[:, Wp + 1:Wp + 1 + m_pad] = (y1 * mask_ref[...]).astype(mid_ref.dtype)

    # ---------------- conv2: same dy-band structure on the intermediate -----
    acc2 = jnp.zeros((cout, m_pad), f32)
    for dy in range(3):
        buf = dy % 2
        for dx in range(3):
            off = dy * Wp + dx
            p_ref[buf, dx * cout:(dx + 1) * cout, :] = mid_ref[:, off:off + m_pad]
        acc2 = acc2 + jnp.dot(w2b_ref[dy], p_ref[buf, 0:3 * cout, :],
                              preferred_element_type=f32)
    o_ref[...] = jnp.maximum(acc2 + b2_ref[...], 0.0).astype(o_ref.dtype)


def double_conv(x_nchw, w1, b1, w2, b2):
    """x_nchw: (N, Cin, H, W) f32; w*: (3,3,Ci,Co) HWIO; b*: (Co,). Returns NCHW f32."""
    N, Cin, H, W = x_nchw.shape
    Cout = w1.shape[3]

    Cin_p = _round_up(Cin, 8)
    Cout_p = _round_up(Cout, 8)
    Cmax = max(Cin_p, Cout_p)

    Wp, Hp = W + 2, H + 3          # 1 top / 2 bottom pad rows, 1 left / 1 right col
    M = H * Wp                     # valid output slots in padded-width coords
    M_pad = _round_up(M, 128)      # lane-dense stores
    Lp_frame = Hp * Wp
    Lp_pad = _round_up(max(Lp_frame, 2 * Wp + 2 + M_pad), 128)
    Lmid_pad = _round_up(2 * Wp + 2 + M_pad, 128)

    # Input: pad channels to Cin_p, pad spatially, flatten, pad tail, cast bf16.
    x_pad = jnp.pad(x_nchw, ((0, 0), (0, Cin_p - Cin), (1, 2), (1, 1)))
    x_flat = x_pad.reshape(N, Cin_p, Lp_frame)
    x_flat = jnp.pad(x_flat, ((0, 0), (0, 0), (0, Lp_pad - Lp_frame)))
    x_flat = x_flat.astype(jnp.bfloat16)

    # Weights: zero-pad channels, group into per-dy bands (3, Co, 3*Ci), bf16.
    w1p = jnp.pad(w1, ((0, 0), (0, 0), (0, Cin_p - Cin), (0, Cout_p - Cout)))
    w1b = w1p.reshape(3, 3 * Cin_p, Cout_p).transpose(0, 2, 1).astype(jnp.bfloat16)
    w2p = jnp.pad(w2, ((0, 0), (0, 0), (0, Cout_p - Cout), (0, Cout_p - Cout)))
    w2b = w2p.reshape(3, 3 * Cout_p, Cout_p).transpose(0, 2, 1).astype(jnp.bfloat16)
    b1c = jnp.pad(b1, (0, Cout_p - Cout)).reshape(Cout_p, 1).astype(jnp.float32)
    b2c = jnp.pad(b2, (0, Cout_p - Cout)).reshape(Cout_p, 1).astype(jnp.float32)

    # Lane mask: 1.0 on real output columns, 0.0 on per-row pad columns AND on
    # every m >= M (the M -> M_pad padding region).
    m_idx = jnp.arange(M_pad, dtype=jnp.int32)
    mask = ((m_idx < M) & (m_idx % Wp < W)).astype(jnp.float32).reshape(1, M_pad)

    kernel = functools.partial(_double_conv_kernel, Wp=Wp)

    out_flat = pl.pallas_call(
        kernel,
        out_shape=jax.ShapeDtypeStruct((N, Cout_p, M_pad), x_nchw.dtype),
        grid=(N,),
        in_specs=[
            pl.BlockSpec((None, Cin_p, Lp_pad), lambda n: (n, 0, 0)),
            pl.BlockSpec((3, Cout_p, 3 * Cin_p), lambda n: (0, 0, 0)),
            pl.BlockSpec((Cout_p, 1), lambda n: (0, 0)),
            pl.BlockSpec((3, Cout_p, 3 * Cout_p), lambda n: (0, 0, 0)),
            pl.BlockSpec((Cout_p, 1), lambda n: (0, 0)),
            pl.BlockSpec((1, M_pad), lambda n: (0, 0)),
        ],
        out_specs=pl.BlockSpec((None, Cout_p, M_pad), lambda n: (n, 0, 0)),
        scratch_shapes=[
            pltpu.VMEM((2, 3 * Cmax, M_pad), jnp.bfloat16),   # im2col bands (2-deep)
            pltpu.VMEM((Cout_p, Lmid_pad), jnp.bfloat16),     # padded intermediate
        ],
        compiler_params=pltpu.CompilerParams(
            dimension_semantics=("parallel",)),
    )(x_flat, w1b, b1c, w2b, b2c, mask)

    # Strip padded channels / padded columns (cheap XLA slice); already NCHW.
    # TODO(synk): for fused consumers keep the padded-width layout to avoid this
    # extra HBM round trip at memory-bound sizes.
    out = out_flat[:, :Cout, :M].reshape(N, Cout, H, Wp)[:, :, :, :W]
    return out


def _ref_double_conv(x, w1, b1, w2, b2):
    """Pure-JAX reference (matches PyTorch Conv2d(k=3, pad=1) + ReLU, twice)."""
    dn = ("NCHW", "HWIO", "NCHW")
    y = jax.lax.conv_general_dilated(x, w1, (1, 1), "SAME", dimension_numbers=dn)
    y = jnp.maximum(y + b1[None, :, None, None], 0.0)
    y = jax.lax.conv_general_dilated(y, w2, (1, 1), "SAME", dimension_numbers=dn)
    y = jnp.maximum(y + b2[None, :, None, None], 0.0)
    return y


if __name__ == "__main__":
    # Small shapes consistent with the module: batch=2, in=4, out=8, spatial=16.
    N, Cin, Cout, H, W = 2, 4, 8, 16, 16

    key = jax.random.PRNGKey(0)
    kx, kw1, kb1, kw2, kb2 = jax.random.split(key, 5)

    x = jax.random.normal(kx, (N, Cin, H, W), jnp.float32)
    w1 = jax.random.normal(kw1, (3, 3, Cin, Cout), jnp.float32) * 0.1
    b1 = jax.random.normal(kb1, (Cout,), jnp.float32) * 0.1
    w2 = jax.random.normal(kw2, (3, 3, Cout, Cout), jnp.float32) * 0.1
    b2 = jax.random.normal(kb2, (Cout,), jnp.float32) * 0.1

    out = jax.block_until_ready(double_conv(x, w1, b1, w2, b2))
    ref = jax.block_until_ready(_ref_double_conv(x, w1, b1, w2, b2))

    assert out.shape == (N, Cout, H, W), out.shape
    # bf16 MXU operands -> loosened tolerance (per perf review).
    assert jnp.allclose(out, ref, atol=3e-2, rtol=3e-2), "mismatch vs reference"

    print("KERNEL_OK")
</pallas_src>

<mosaic_0001>
module attributes {stable_mosaic.version = 11 : i64} {
  func.func @_double_conv_kernel(%arg0: i32, %arg1: memref<1x8x512xbf16, #tpu.memory_space<vmem>>, %arg2: memref<3x8x24xbf16, #tpu.memory_space<vmem>>, %arg3: memref<8x1xf32, #tpu.memory_space<vmem>>, %arg4: memref<3x8x24xbf16, #tpu.memory_space<vmem>>, %arg5: memref<8x1xf32, #tpu.memory_space<vmem>>, %arg6: memref<1x384xf32, #tpu.memory_space<vmem>>, %arg7: memref<1x8x384xf32, #tpu.memory_space<vmem>>, %arg8: memref<2x24x384xbf16, #tpu.memory_space<vmem>>, %arg9: memref<8x512xbf16, #tpu.memory_space<vmem>>) attributes {dimension_semantics = [#tpu.dimension_semantics<parallel>], iteration_bounds = array<i64: 2>, scalar_prefetch = 0 : i64, scratch_operands = 2 : i64, tpu.core_type = #tpu.core_type<tc>, window_params = [{transform_indices = @transform_0, window_bounds = array<i64: 1, 8, 512>}, {pipeline_mode = #tpu.pipeline_mode<synchronous>, transform_indices = @transform_1, window_bounds = array<i64: 3, 8, 24>}, {pipeline_mode = #tpu.pipeline_mode<synchronous>, transform_indices = @transform_2, window_bounds = array<i64: 8, 1>}, {pipeline_mode = #tpu.pipeline_mode<synchronous>, transform_indices = @transform_3, window_bounds = array<i64: 3, 8, 24>}, {pipeline_mode = #tpu.pipeline_mode<synchronous>, transform_indices = @transform_4, window_bounds = array<i64: 8, 1>}, {pipeline_mode = #tpu.pipeline_mode<synchronous>, transform_indices = @transform_5, window_bounds = array<i64: 1, 384>}, {transform_indices = @transform_6, window_bounds = array<i64: 1, 8, 384>}]} {
    %cst = arith.constant 0.000000e+00 : f32
    %0 = vector.broadcast %cst : f32 to vector<8x384xf32>
    %c0 = arith.constant 0 : index
    %c0_0 = arith.constant 0 : index
    %c0_1 = arith.constant 0 : index
    %1 = vector.load %arg1[%c0, %c0_0, %c0_1] : memref<1x8x512xbf16, #tpu.memory_space<vmem>>, vector<1x8x384xbf16>
    %2 = vector.shape_cast %1 : vector<1x8x384xbf16> to vector<8x384xbf16>
    %c0_2 = arith.constant 0 : index
    %c0_3 = arith.constant 0 : index
    %c0_4 = arith.constant 0 : index
    %3 = vector.load %arg8[%c0_2, %c0_3, %c0_4] : memref<2x24x384xbf16, #tpu.memory_space<vmem>>, vector<1x8x384xbf16>
    %4 = vector.shape_cast %3 : vector<1x8x384xbf16> to vector<8x384xbf16>
    %5 = vector.shape_cast %2 : vector<8x384xbf16> to vector<1x8x384xbf16>
    tpu.vector_store %arg8[%c0_2, %c0_3, %c0_4], %5 {strides = array<i32>} : memref<2x24x384xbf16, #tpu.memory_space<vmem>>, vector<1x8x384xbf16>,
    %c0_5 = arith.constant 0 : index
    %c0_6 = arith.constant 0 : index
    %c1 = arith.constant 1 : index
    %6 = vector.load %arg1[%c0_5, %c0_6, %c1] : memref<1x8x512xbf16, #tpu.memory_space<vmem>>, vector<1x8x384xbf16>
    %7 = vector.shape_cast %6 : vector<1x8x384xbf16> to vector<8x384xbf16>
    %c0_7 = arith.constant 0 : index
    %c8 = arith.constant 8 : index
    %c0_8 = arith.constant 0 : index
    %8 = vector.load %arg8[%c0_7, %c8, %c0_8] : memref<2x24x384xbf16, #tpu.memory_space<vmem>>, vector<1x8x384xbf16>
    %9 = vector.shape_cast %8 : vector<1x8x384xbf16> to vector<8x384xbf16>
    %10 = vector.shape_cast %7 : vector<8x384xbf16> to vector<1x8x384xbf16>
    tpu.vector_store %arg8[%c0_7, %c8, %c0_8], %10 {strides = array<i32>} : memref<2x24x384xbf16, #tpu.memory_space<vmem>>, vector<1x8x384xbf16>,
    %c0_9 = arith.constant 0 : index
    %c0_10 = arith.constant 0 : index
    %c2 = arith.constant 2 : index
    %11 = vector.load %arg1[%c0_9, %c0_10, %c2] : memref<1x8x512xbf16, #tpu.memory_space<vmem>>, vector<1x8x384xbf16>
    %12 = vector.shape_cast %11 : vector<1x8x384xbf16> to vector<8x384xbf16>
    %c0_11 = arith.constant 0 : index
    %c16 = arith.constant 16 : index
    %c0_12 = arith.constant 0 : index
    %13 = vector.load %arg8[%c0_11, %c16, %c0_12] : memref<2x24x384xbf16, #tpu.memory_space<vmem>>, vector<1x8x384xbf16>
    %14 = vector.shape_cast %13 : vector<1x8x384xbf16> to vector<8x384xbf16>
    %15 = vector.shape_cast %12 : vector<8x384xbf16> to vector<1x8x384xbf16>
    tpu.vector_store %arg8[%c0_11, %c16, %c0_12], %15 {strides = array<i32>} : memref<2x24x384xbf16, #tpu.memory_space<vmem>>, vector<1x8x384xbf16>,
    %c0_13 = arith.constant 0 : index
    %c0_14 = arith.constant 0 : index
    %c0_15 = arith.constant 0 : index
    %16 = vector.load %arg2[%c0_13, %c0_14, %c0_15] : memref<3x8x24xbf16, #tpu.memory_space<vmem>>, vector<1x8x24xbf16>
    %17 = vector.shape_cast %16 : vector<1x8x24xbf16> to vector<8x24xbf16>
    %c0_16 = arith.constant 0 : index
    %c0_17 = arith.constant 0 : index
    %c0_18 = arith.constant 0 : index
    %18 = vector.load %arg8[%c0_16, %c0_17, %c0_18] : memref<2x24x384xbf16, #tpu.memory_space<vmem>>, vector<1x24x384xbf16>
    %19 = vector.shape_cast %18 : vector<1x24x384xbf16> to vector<24x384xbf16>
    %cst_19 = arith.constant dense<0.000000e+00> : vector<8x384xf32>
    %20 = tpu.matmul %17, %19, %cst_19 {dimension_numbers = #tpu.dot_dimension_numbers<[1], [0], [0], [1], [0, 0, 1, 1], [], []>} : vector<8x24xbf16>, vector<24x384xbf16>, vector<8x384xf32> -> vector<8x384xf32>
    %21 = arith.addf %0, %20 : vector<8x384xf32>
    %c0_20 = arith.constant 0 : index
    %c0_21 = arith.constant 0 : index
    %c18 = arith.constant 18 : index
    %22 = vector.load %arg1[%c0_20, %c0_21, %c18] : memref<1x8x512xbf16, #tpu.memory_space<vmem>>, vector<1x8x384xbf16>
    %23 = vector.shape_cast %22 : vector<1x8x384xbf16> to vector<8x384xbf16>
    %c1_22 = arith.constant 1 : index
    %c0_23 = arith.constant 0 : index
    %c0_24 = arith.constant 0 : index
    %24 = vector.load %arg8[%c1_22, %c0_23, %c0_24] : memref<2x24x384xbf16, #tpu.memory_space<vmem>>, vector<1x8x384xbf16>
    %25 = vector.shape_cast %24 : vector<1x8x384xbf16> to vector<8x384xbf16>
    %26 = vector.shape_cast %23 : vector<8x384xbf16> to vector<1x8x384xbf16>
    tpu.vector_store %arg8[%c1_22, %c0_23, %c0_24], %26 {strides = array<i32>} : memref<2x24x384xbf16, #tpu.memory_space<vmem>>, vector<1x8x384xbf16>,
    %c0_25 = arith.constant 0 : index
    %c0_26 = arith.constant 0 : index
    %c19 = arith.constant 19 : index
    %27 = vector.load %arg1[%c0_25, %c0_26, %c19] : memref<1x8x512xbf16, #tpu.memory_space<vmem>>, vector<1x8x384xbf16>
    %28 = vector.shape_cast %27 : vector<1x8x384xbf16> to vector<8x384xbf16>
    %c1_27 = arith.constant 1 : index
    %c8_28 = arith.constant 8 : index
    %c0_29 = arith.constant 0 : index
    %29 = vector.load %arg8[%c1_27, %c8_28, %c0_29] : memref<2x24x384xbf16, #tpu.memory_space<vmem>>, vector<1x8x384xbf16>
    %30 = vector.shape_cast %29 : vector<1x8x384xbf16> to vector<8x384xbf16>
    %31 = vector.shape_cast %28 : vector<8x384xbf16> to vector<1x8x384xbf16>
    tpu.vector_store %arg8[%c1_27, %c8_28, %c0_29], %31 {strides = array<i32>} : memref<2x24x384xbf16, #tpu.memory_space<vmem>>, vector<1x8x384xbf16>,
    %c0_30 = arith.constant 0 : index
    %c0_31 = arith.constant 0 : index
    %c20 = arith.constant 20 : index
    %32 = vector.load %arg1[%c0_30, %c0_31, %c20] : memref<1x8x512xbf16, #tpu.memory_space<vmem>>, vector<1x8x384xbf16>
    %33 = vector.shape_cast %32 : vector<1x8x384xbf16> to vector<8x384xbf16>
    %c1_32 = arith.constant 1 : index
    %c16_33 = arith.constant 16 : index
    %c0_34 = arith.constant 0 : index
    %34 = vector.load %arg8[%c1_32, %c16_33, %c0_34] : memref<2x24x384xbf16, #tpu.memory_space<vmem>>, vector<1x8x384xbf16>
    %35 = vector.shape_cast %34 : vector<1x8x384xbf16> to vector<8x384xbf16>
    %36 = vector.shape_cast %33 : vector<8x384xbf16> to vector<1x8x384xbf16>
    tpu.vector_store %arg8[%c1_32, %c16_33, %c0_34], %36 {strides = array<i32>} : memref<2x24x384xbf16, #tpu.memory_space<vmem>>, vector<1x8x384xbf16>,
    %c1_35 = arith.constant 1 : index
    %c0_36 = arith.constant 0 : index
    %c0_37 = arith.constant 0 : index
    %37 = vector.load %arg2[%c1_35, %c0_36, %c0_37] : memref<3x8x24xbf16, #tpu.memory_space<vmem>>, vector<1x8x24xbf16>
    %38 = vector.shape_cast %37 : vector<1x8x24xbf16> to vector<8x24xbf16>
    %c1_38 = arith.constant 1 : index
    %c0_39 = arith.constant 0 : index
    %c0_40 = arith.constant 0 : index
    %39 = vector.load %arg8[%c1_38, %c0_39, %c0_40] : memref<2x24x384xbf16, #tpu.memory_space<vmem>>, vector<1x24x384xbf16>
    %40 = vector.shape_cast %39 : vector<1x24x384xbf16> to vector<24x384xbf16>
    %cst_41 = arith.constant dense<0.000000e+00> : vector<8x384xf32>
    %41 = tpu.matmul %38, %40, %cst_41 {dimension_numbers = #tpu.dot_dimension_numbers<[1], [0], [0], [1], [0, 0, 1, 1], [], []>} : vector<8x24xbf16>, vector<24x384xbf16>, vector<8x384xf32> -> vector<8x384xf32>
    %42 = arith.addf %21, %41 : vector<8x384xf32>
    %c0_42 = arith.constant 0 : index
    %c0_43 = arith.constant 0 : index
    %c36 = arith.constant 36 : index
    %43 = vector.load %arg1[%c0_42, %c0_43, %c36] : memref<1x8x512xbf16, #tpu.memory_space<vmem>>, vector<1x8x384xbf16>
    %44 = vector.shape_cast %43 : vector<1x8x384xbf16> to vector<8x384xbf16>
    %c0_44 = arith.constant 0 : index
    %c0_45 = arith.constant 0 : index
    %c0_46 = arith.constant 0 : index
    %45 = vector.load %arg8[%c0_44, %c0_45, %c0_46] : memref<2x24x384xbf16, #tpu.memory_space<vmem>>, vector<1x8x384xbf16>
    %46 = vector.shape_cast %45 : vector<1x8x384xbf16> to vector<8x384xbf16>
    %47 = vector.shape_cast %44 : vector<8x384xbf16> to vector<1x8x384xbf16>
    tpu.vector_store %arg8[%c0_44, %c0_45, %c0_46], %47 {strides = array<i32>} : memref<2x24x384xbf16, #tpu.memory_space<vmem>>, vector<1x8x384xbf16>,
    %c0_47 = arith.constant 0 : index
    %c0_48 = arith.constant 0 : index
    %c37 = arith.constant 37 : index
    %48 = vector.load %arg1[%c0_47, %c0_48, %c37] : memref<1x8x512xbf16, #tpu.memory_space<vmem>>, vector<1x8x384xbf16>
    %49 = vector.shape_cast %48 : vector<1x8x384xbf16> to vector<8x384xbf16>
    %c0_49 = arith.constant 0 : index
    %c8_50 = arith.constant 8 : index
    %c0_51 = arith.constant 0 : index
    %50 = vector.load %arg8[%c0_49, %c8_50, %c0_51] : memref<2x24x384xbf16, #tpu.memory_space<vmem>>, vector<1x8x384xbf16>
    %51 = vector.shape_cast %50 : vector<1x8x384xbf16> to vector<8x384xbf16>
    %52 = vector.shape_cast %49 : vector<8x384xbf16> to vector<1x8x384xbf16>
    tpu.vector_store %arg8[%c0_49, %c8_50, %c0_51], %52 {strides = array<i32>} : memref<2x24x384xbf16, #tpu.memory_space<vmem>>, vector<1x8x384xbf16>,
    %c0_52 = arith.constant 0 : index
    %c0_53 = arith.constant 0 : index
    %c38 = arith.constant 38 : index
    %53 = vector.load %arg1[%c0_52, %c0_53, %c38] : memref<1x8x512xbf16, #tpu.memory_space<vmem>>, vector<1x8x384xbf16>
    %54 = vector.shape_cast %53 : vector<1x8x384xbf16> to vector<8x384xbf16>
    %c0_54 = arith.constant 0 : index
    %c16_55 = arith.constant 16 : index
    %c0_56 = arith.constant 0 : index
    %55 = vector.load %arg8[%c0_54, %c16_55, %c0_56] : memref<2x24x384xbf16, #tpu.memory_space<vmem>>, vector<1x8x384xbf16>
    %56 = vector.shape_cast %55 : vector<1x8x384xbf16> to vector<8x384xbf16>
    %57 = vector.shape_cast %54 : vector<8x384xbf16> to vector<1x8x384xbf16>
    tpu.vector_store %arg8[%c0_54, %c16_55, %c0_56], %57 {strides = array<i32>} : memref<2x24x384xbf16, #tpu.memory_space<vmem>>, vector<1x8x384xbf16>,
    %c2_57 = arith.constant 2 : index
    %c0_58 = arith.constant 0 : index
    %c0_59 = arith.constant 0 : index
    %58 = vector.load %arg2[%c2_57, %c0_58, %c0_59] : memref<3x8x24xbf16, #tpu.memory_space<vmem>>, vector<1x8x24xbf16>
    %59 = vector.shape_cast %58 : vector<1x8x24xbf16> to vector<8x24xbf16>
    %c0_60 = arith.constant 0 : index
    %c0_61 = arith.constant 0 : index
    %c0_62 = arith.constant 0 : index
    %60 = vector.load %arg8[%c0_60, %c0_61, %c0_62] : memref<2x24x384xbf16, #tpu.memory_space<vmem>>, vector<1x24x384xbf16>
    %61 = vector.shape_cast %60 : vector<1x24x384xbf16> to vector<24x384xbf16>
    %cst_63 = arith.constant dense<0.000000e+00> : vector<8x384xf32>
    %62 = tpu.matmul %59, %61, %cst_63 {dimension_numbers = #tpu.dot_dimension_numbers<[1], [0], [0], [1], [0, 0, 1, 1], [], []>} : vector<8x24xbf16>, vector<24x384xbf16>, vector<8x384xf32> -> vector<8x384xf32>
    %63 = arith.addf %42, %62 : vector<8x384xf32>
    %c0_64 = arith.constant 0 : index
    %c0_65 = arith.constant 0 : index
    %64 = vector.load %arg3[%c0_64, %c0_65] : memref<8x1xf32, #tpu.memory_space<vmem>>, vector<8x1xf32>
    %65 = vector.broadcast %64 : vector<8x1xf32> to vector<8x384xf32>
    %66 = arith.addf %63, %65 : vector<8x384xf32>
    %cst_66 = arith.constant 0.000000e+00 : f32
    %67 = vector.broadcast %cst_66 : f32 to vector<8x384xf32>
    %68 = arith.maximumf %66, %67 : vector<8x384xf32>
    %cst_67 = arith.constant 0.000000e+00 : bf16
    %69 = vector.broadcast %cst_67 : bf16 to vector<8x19xbf16>
    %c0_68 = arith.constant 0 : index
    %c0_69 = arith.constant 0 : index
    %70 = vector.load %arg9[%c0_68, %c0_69] : memref<8x512xbf16, #tpu.memory_space<vmem>>, vector<8x19xbf16>
    tpu.vector_store %arg9[%c0_68, %c0_69], %69 {strides = array<i32>} : memref<8x512xbf16, #tpu.memory_space<vmem>>, vector<8x19xbf16>,
    %cst_70 = arith.constant 0.000000e+00 : bf16
    %71 = vector.broadcast %cst_70 : bf16 to vector<8x109xbf16>
    %c0_71 = arith.constant 0 : index
    %c403 = arith.constant 403 : index
    %72 = vector.load %arg9[%c0_71, %c403] : memref<8x512xbf16, #tpu.memory_space<vmem>>, vector<8x109xbf16>
    tpu.vector_store %arg9[%c0_71, %c403], %71 {strides = array<i32>} : memref<8x512xbf16, #tpu.memory_space<vmem>>, vector<8x109xbf16>,
    %c0_72 = arith.constant 0 : index
    %c0_73 = arith.constant 0 : index
    %73 = vector.load %arg6[%c0_72, %c0_73] : memref<1x384xf32, #tpu.memory_space<vmem>>, vector<1x384xf32>
    %74 = vector.broadcast %73 : vector<1x384xf32> to vector<8x384xf32>
    %75 = arith.mulf %68, %74 : vector<8x384xf32>
    %76 = arith.truncf %75 : vector<8x384xf32> to vector<8x384xbf16>
    %c0_74 = arith.constant 0 : index
    %c19_75 = arith.constant 19 : index
    %77 = vector.load %arg9[%c0_74, %c19_75] : memref<8x512xbf16, #tpu.memory_space<vmem>>, vector<8x384xbf16>
    tpu.vector_store %arg9[%c0_74, %c19_75], %76 {strides = array<i32>} : memref<8x512xbf16, #tpu.memory_space<vmem>>, vector<8x384xbf16>,
    %cst_76 = arith.constant 0.000000e+00 : f32
    %78 = vector.broadcast %cst_76 : f32 to vector<8x384xf32>
    %c0_77 = arith.constant 0 : index
    %c0_78 = arith.constant 0 : index
    %79 = vector.load %arg9[%c0_77, %c0_78] : memref<8x512xbf16, #tpu.memory_space<vmem>>, vector<8x384xbf16>
    %c0_79 = arith.constant 0 : index
    %c0_80 = arith.constant 0 : index
    %c0_81 = arith.constant 0 : index
    %80 = vector.load %arg8[%c0_79, %c0_80, %c0_81] : memref<2x24x384xbf16, #tpu.memory_space<vmem>>, vector<1x8x384xbf16>
    %81 = vector.shape_cast %80 : vector<1x8x384xbf16> to vector<8x384xbf16>
    %82 = vector.shape_cast %79 : vector<8x384xbf16> to vector<1x8x384xbf16>
    tpu.vector_store %arg8[%c0_79, %c0_80, %c0_81], %82 {strides = array<i32>} : memref<2x24x384xbf16, #tpu.memory_space<vmem>>, vector<1x8x384xbf16>,
    %c0_82 = arith.constant 0 : index
    %c1_83 = arith.constant 1 : index
    %83 = vector.load %arg9[%c0_82, %c1_83] : memref<8x512xbf16, #tpu.memory_space<vmem>>, vector<8x384xbf16>
    %c0_84 = arith.constant 0 : index
    %c8_85 = arith.constant 8 : index
    %c0_86 = arith.constant 0 : index
    %84 = vector.load %arg8[%c0_84, %c8_85, %c0_86] : memref<2x24x384xbf16, #tpu.memory_space<vmem>>, vector<1x8x384xbf16>
    %85 = vector.shape_cast %84 : vector<1x8x384xbf16> to vector<8x384xbf16>
    %86 = vector.shape_cast %83 : vector<8x384xbf16> to vector<1x8x384xbf16>
    tpu.vector_store %arg8[%c0_84, %c8_85, %c0_86], %86 {strides = array<i32>} : memref<2x24x384xbf16, #tpu.memory_space<vmem>>, vector<1x8x384xbf16>,
    %c0_87 = arith.constant 0 : index
    %c2_88 = arith.constant 2 : index
    %87 = vector.load %arg9[%c0_87, %c2_88] : memref<8x512xbf16, #tpu.memory_space<vmem>>, vector<8x384xbf16>
    %c0_89 = arith.constant 0 : index
    %c16_90 = arith.constant 16 : index
    %c0_91 = arith.constant 0 : index
    %88 = vector.load %arg8[%c0_89, %c16_90, %c0_91] : memref<2x24x384xbf16, #tpu.memory_space<vmem>>, vector<1x8x384xbf16>
    %89 = vector.shape_cast %88 : vector<1x8x384xbf16> to vector<8x384xbf16>
    %90 = vector.shape_cast %87 : vector<8x384xbf16> to vector<1x8x384xbf16>
    tpu.vector_store %arg8[%c0_89, %c16_90, %c0_91], %90 {strides = array<i32>} : memref<2x24x384xbf16, #tpu.memory_space<vmem>>, vector<1x8x384xbf16>,
    %c0_92 = arith.constant 0 : index
    %c0_93 = arith.constant 0 : index
    %c0_94 = arith.constant 0 : index
    %91 = vector.load %arg4[%c0_92, %c0_93, %c0_94] : memref<3x8x24xbf16, #tpu.memory_space<vmem>>, vector<1x8x24xbf16>
    %92 = vector.shape_cast %91 : vector<1x8x24xbf16> to vector<8x24xbf16>
    %c0_95 = arith.constant 0 : index
    %c0_96 = arith.constant 0 : index
    %c0_97 = arith.constant 0 : index
    %93 = vector.load %arg8[%c0_95, %c0_96, %c0_97] : memref<2x24x384xbf16, #tpu.memory_space<vmem>>, vector<1x24x384xbf16>
    %94 = vector.shape_cast %93 : vector<1x24x384xbf16> to vector<24x384xbf16>
    %cst_98 = arith.constant dense<0.000000e+00> : vector<8x384xf32>
    %95 = tpu.matmul %92, %94, %cst_98 {dimension_numbers = #tpu.dot_dimension_numbers<[1], [0], [0], [1], [0, 0, 1, 1], [], []>} : vector<8x24xbf16>, vector<24x384xbf16>, vector<8x384xf32> -> vector<8x384xf32>
    %96 = arith.addf %78, %95 : vector<8x384xf32>
    %c0_99 = arith.constant 0 : index
    %c18_100 = arith.constant 18 : index
    %97 = vector.load %arg9[%c0_99, %c18_100] : memref<8x512xbf16, #tpu.memory_space<vmem>>, vector<8x384xbf16>
    %c1_101 = arith.constant 1 : index
    %c0_102 = arith.constant 0 : index
    %c0_103 = arith.constant 0 : index
    %98 = vector.load %arg8[%c1_101, %c0_102, %c0_103] : memref<2x24x384xbf16, #tpu.memory_space<vmem>>, vector<1x8x384xbf16>
    %99 = vector.shape_cast %98 : vector<1x8x384xbf16> to vector<8x384xbf16>
    %100 = vector.shape_cast %97 : vector<8x384xbf16> to vector<1x8x384xbf16>
    tpu.vector_store %arg8[%c1_101, %c0_102, %c0_103], %100 {strides = array<i32>} : memref<2x24x384xbf16, #tpu.memory_space<vmem>>, vector<1x8x384xbf16>,
    %c0_104 = arith.constant 0 : index
    %c19_105 = arith.constant 19 : index
    %101 = vector.load %arg9[%c0_104, %c19_105] : memref<8x512xbf16, #tpu.memory_space<vmem>>, vector<8x384xbf16>
    %c1_106 = arith.constant 1 : index
    %c8_107 = arith.constant 8 : index
    %c0_108 = arith.constant 0 : index
    %102 = vector.load %arg8[%c1_106, %c8_107, %c0_108] : memref<2x24x384xbf16, #tpu.memory_space<vmem>>, vector<1x8x384xbf16>
    %103 = vector.shape_cast %102 : vector<1x8x384xbf16> to vector<8x384xbf16>
    %104 = vector.shape_cast %101 : vector<8x384xbf16> to vector<1x8x384xbf16>
    tpu.vector_store %arg8[%c1_106, %c8_107, %c0_108], %104 {strides = array<i32>} : memref<2x24x384xbf16, #tpu.memory_space<vmem>>, vector<1x8x384xbf16>,
    %c0_109 = arith.constant 0 : index
    %c20_110 = arith.constant 20 : index
    %105 = vector.load %arg9[%c0_109, %c20_110] : memref<8x512xbf16, #tpu.memory_space<vmem>>, vector<8x384xbf16>
    %c1_111 = arith.constant 1 : index
    %c16_112 = arith.constant 16 : index
    %c0_113 = arith.constant 0 : index
    %106 = vector.load %arg8[%c1_111, %c16_112, %c0_113] : memref<2x24x384xbf16, #tpu.memory_space<vmem>>, vector<1x8x384xbf16>
    %107 = vector.shape_cast %106 : vector<1x8x384xbf16> to vector<8x384xbf16>
    %108 = vector.shape_cast %105 : vector<8x384xbf16> to vector<1x8x384xbf16>
    tpu.vector_store %arg8[%c1_111, %c16_112, %c0_113], %108 {strides = array<i32>} : memref<2x24x384xbf16, #tpu.memory_space<vmem>>, vector<1x8x384xbf16>,
    %c1_114 = arith.constant 1 : index
    %c0_115 = arith.constant 0 : index
    %c0_116 = arith.constant 0 : index
    %109 = vector.load %arg4[%c1_114, %c0_115, %c0_116] : memref<3x8x24xbf16, #tpu.memory_space<vmem>>, vector<1x8x24xbf16>
    %110 = vector.shape_cast %109 : vector<1x8x24xbf16> to vector<8x24xbf16>
    %c1_117 = arith.constant 1 : index
    %c0_118 = arith.constant 0 : index
    %c0_119 = arith.constant 0 : index
    %111 = vector.load %arg8[%c1_117, %c0_118, %c0_119] : memref<2x24x384xbf16, #tpu.memory_space<vmem>>, vector<1x24x384xbf16>
    %112 = vector.shape_cast %111 : vector<1x24x384xbf16> to vector<24x384xbf16>
    %cst_120 = arith.constant dense<0.000000e+00> : vector<8x384xf32>
    %113 = tpu.matmul %110, %112, %cst_120 {dimension_numbers = #tpu.dot_dimension_numbers<[1], [0], [0], [1], [0, 0, 1, 1], [], []>} : vector<8x24xbf16>, vector<24x384xbf16>, vector<8x384xf32> -> vector<8x384xf32>
    %114 = arith.addf %96, %113 : vector<8x384xf32>
    %c0_121 = arith.constant 0 : index
    %c36_122 = arith.constant 36 : index
    %115 = vector.load %arg9[%c0_121, %c36_122] : memref<8x512xbf16, #tpu.memory_space<vmem>>, vector<8x384xbf16>
    %c0_123 = arith.constant 0 : index
    %c0_124 = arith.constant 0 : index
    %c0_125 = arith.constant 0 : index
    %116 = vector.load %arg8[%c0_123, %c0_124, %c0_125] : memref<2x24x384xbf16, #tpu.memory_space<vmem>>, vector<1x8x384xbf16>
    %117 = vector.shape_cast %116 : vector<1x8x384xbf16> to vector<8x384xbf16>
    %118 = vector.shape_cast %115 : vector<8x384xbf16> to vector<1x8x384xbf16>
    tpu.vector_store %arg8[%c0_123, %c0_124, %c0_125], %118 {strides = array<i32>} : memref<2x24x384xbf16, #tpu.memory_space<vmem>>, vector<1x8x384xbf16>,
    %c0_126 = arith.constant 0 : index
    %c37_127 = arith.constant 37 : index
    %119 = vector.load %arg9[%c0_126, %c37_127] : memref<8x512xbf16, #tpu.memory_space<vmem>>, vector<8x384xbf16>
    %c0_128 = arith.constant 0 : index
    %c8_129 = arith.constant 8 : index
    %c0_130 = arith.constant 0 : index
    %120 = vector.load %arg8[%c0_128, %c8_129, %c0_130] : memref<2x24x384xbf16, #tpu.memory_space<vmem>>, vector<1x8x384xbf16>
    %121 = vector.shape_cast %120 : vector<1x8x384xbf16> to vector<8x384xbf16>
    %122 = vector.shape_cast %119 : vector<8x384xbf16> to vector<1x8x384xbf16>
    tpu.vector_store %arg8[%c0_128, %c8_129, %c0_130], %122 {strides = array<i32>} : memref<2x24x384xbf16, #tpu.memory_space<vmem>>, vector<1x8x384xbf16>,
    %c0_131 = arith.constant 0 : index
    %c38_132 = arith.constant 38 : index
    %123 = vector.load %arg9[%c0_131, %c38_132] : memref<8x512xbf16, #tpu.memory_space<vmem>>, vector<8x384xbf16>
    %c0_133 = arith.constant 0 : index
    %c16_134 = arith.constant 16 : index
    %c0_135 = arith.constant 0 : index
    %124 = vector.load %arg8[%c0_133, %c16_134, %c0_135] : memref<2x24x384xbf16, #tpu.memory_space<vmem>>, vector<1x8x384xbf16>
    %125 = vector.shape_cast %124 : vector<1x8x384xbf16> to vector<8x384xbf16>
    %126 = vector.shape_cast %123 : vector<8x384xbf16> to vector<1x8x384xbf16>
    tpu.vector_store %arg8[%c0_133, %c16_134, %c0_135], %126 {strides = array<i32>} : memref<2x24x384xbf16, #tpu.memory_space<vmem>>, vector<1x8x384xbf16>,
    %c2_136 = arith.constant 2 : index
    %c0_137 = arith.constant 0 : index
    %c0_138 = arith.constant 0 : index
    %127 = vector.load %arg4[%c2_136, %c0_137, %c0_138] : memref<3x8x24xbf16, #tpu.memory_space<vmem>>, vector<1x8x24xbf16>
    %128 = vector.shape_cast %127 : vector<1x8x24xbf16> to vector<8x24xbf16>
    %c0_139 = arith.constant 0 : index
    %c0_140 = arith.constant 0 : index
    %c0_141 = arith.constant 0 : index
    %129 = vector.load %arg8[%c0_139, %c0_140, %c0_141] : memref<2x24x384xbf16, #tpu.memory_space<vmem>>, vector<1x24x384xbf16>
    %130 = vector.shape_cast %129 : vector<1x24x384xbf16> to vector<24x384xbf16>
    %cst_142 = arith.constant dense<0.000000e+00> : vector<8x384xf32>
    %131 = tpu.matmul %128, %130, %cst_142 {dimension_numbers = #tpu.dot_dimension_numbers<[1], [0], [0], [1], [0, 0, 1, 1], [], []>} : vector<8x24xbf16>, vector<24x384xbf16>, vector<8x384xf32> -> vector<8x384xf32>
    %132 = arith.addf %114, %131 : vector<8x384xf32>
    %c0_143 = arith.constant 0 : index
    %c0_144 = arith.constant 0 : index
    %133 = vector.load %arg5[%c0_143, %c0_144] : memref<8x1xf32, #tpu.memory_space<vmem>>, vector<8x1xf32>
    %134 = vector.broadcast %133 : vector<8x1xf32> to vector<8x384xf32>
    %135 = arith.addf %132, %134 : vector<8x384xf32>
    %cst_145 = arith.constant 0.000000e+00 : f32
    %136 = vector.broadcast %cst_145 : f32 to vector<8x384xf32>
    %137 = arith.maximumf %135, %136 : vector<8x384xf32>
    %c0_146 = arith.constant 0 : index
    %c0_147 = arith.constant 0 : index
    %c0_148 = arith.constant 0 : index
    %138 = vector.load %arg7[%c0_146, %c0_147, %c0_148] : memref<1x8x384xf32, #tpu.memory_space<vmem>>, vector<1x8x384xf32>
    %139 = vector.shape_cast %138 : vector<1x8x384xf32> to vector<8x384xf32>
    %140 = vector.shape_cast %137 : vector<8x384xf32> to vector<1x8x384xf32>
    tpu.vector_store %arg7[%c0_146, %c0_147, %c0_148], %140 {strides = array<i32>} : memref<1x8x384xf32, #tpu.memory_space<vmem>>, vector<1x8x384xf32>,
    return
  }
  func.func @transform_0(%arg0: i32) -> (i32, i32, i32) {
    %c0_i32 = arith.constant 0 : i32
    %c0_i32_0 = arith.constant 0 : i32
    %c0_i32_1 = arith.constant 0 : i32
    return %arg0, %c0_i32, %c0_i32_0 : i32, i32, i32
  }
  func.func @transform_1(%arg0: i32) -> (i32, i32, i32) {
    %c0_i32 = arith.constant 0 : i32
    %c0_i32_0 = arith.constant 0 : i32
    %c0_i32_1 = arith.constant 0 : i32
    %c0_i32_2 = arith.constant 0 : i32
    return %c0_i32, %c0_i32_0, %c0_i32_1 : i32, i32, i32
  }
  func.func @transform_2(%arg0: i32) -> (i32, i32) {
    %c0_i32 = arith.constant 0 : i32
    %c0_i32_0 = arith.constant 0 : i32
    %c0_i32_1 = arith.constant 0 : i32
    return %c0_i32, %c0_i32_0 : i32, i32
  }
  func.func @transform_3(%arg0: i32) -> (i32, i32, i32) {
    %c0_i32 = arith.constant 0 : i32
    %c0_i32_0 = arith.constant 0 : i32
    %c0_i32_1 = arith.constant 0 : i32
    %c0_i32_2 = arith.constant 0 : i32
    return %c0_i32, %c0_i32_0, %c0_i32_1 : i32, i32, i32
  }
  func.func @transform_4(%arg0: i32) -> (i32, i32) {
    %c0_i32 = arith.constant 0 : i32
    %c0_i32_0 = arith.constant 0 : i32
    %c0_i32_1 = arith.constant 0 : i32
    return %c0_i32, %c0_i32_0 : i32, i32
  }
  func.func @transform_5(%arg0: i32) -> (i32, i32) {
    %c0_i32 = arith.constant 0 : i32
    %c0_i32_0 = arith.constant 0 : i32
    %c0_i32_1 = arith.constant 0 : i32
    return %c0_i32, %c0_i32_0 : i32, i32
  }
  func.func @transform_6(%arg0: i32) -> (i32, i32, i32) {
    %c0_i32 = arith.constant 0 : i32
    %c0_i32_0 = arith.constant 0 : i32
    %c0_i32_1 = arith.constant 0 : i32
    return %arg0, %c0_i32, %c0_i32_0 : i32, i32, i32
  }
}

</mosaic_0001>

<llo_original>
// kernel: tpu_custom_call.1
$region0: #{tpu_custom_call.1}
  #allocation0 [shape = 'u32[]', space=smem, size = 0x4, offset = 0x4, fixed_abs, tag = 'smem constant byte address 0x4 - core index']
  #allocation1 [shape = 'u32[72,128]{1,0:T(1,128)}', space=vmem, size = 0x9000, scoped, tag = 'internal scratch']
  #allocation2 [shape = 'bf16[2,24,384]{2,1,0:T(8,128)(2,1)}', space=vmem, size = 0x9000, scoped, tag = 'scratch operand']
  #allocation3 [shape = 'bf16[8,512]{1,0:T(8,128)(2,1)}', space=vmem, size = 0x2000, scoped, tag = 'scratch operand']
  %s0 = inlined_call_operand.hbm [shape: bf16[2,8,512], index: 0, kind: input, shape index: {}]
  %s1 = inlined_call_operand.vmem [shape: bf16[3,8,24], index: 1, kind: input, shape index: {}]
  %s2 = inlined_call_operand.vmem [shape: f32[8,1], index: 2, kind: input, shape index: {}]
  %s3 = inlined_call_operand.hbm [shape: bf16[3,8,24], index: 3, kind: input, shape index: {}]
  %s4 = inlined_call_operand.vmem [shape: f32[8,1], index: 4, kind: input, shape index: {}]
  %s5 = inlined_call_operand.vmem [shape: f32[1,384], index: 5, kind: input, shape index: {}]
  %s6 = inlined_call_operand.hbm [shape: f32[2,8,384], index: 6, kind: output, shape index: {}]
  %s7 = sld [smem:[#allocation0]]
  $region65: #{tpu_custom_call.1} parent=0
    _
  %s9 = ssub.s32 1, %s7
  %s10 = scalar_select 0, %s9, %s7
  $region1: #{tpu_custom_call.1} parent=0
    #allocation4 [shape = 'u8[16384]{0}', space=vmem, size = 0x4000, scoped, tag = 'input window, operand 0']
    #allocation5 [shape = 's32[2]{0}', space=sflag, size = 0x8, scoped, tag = 'scoped memory for tpu_custom_call.1']
    #allocation6 [shape = 's32[2]{0}', space=sflag, size = 0x8, scoped, tag = 'scoped memory for tpu_custom_call.1']
    #allocation7 [shape = 'u8[6144]{0}', space=vmem, size = 0x1800, scoped, tag = 'input window, operand 3, single buffered']
    #allocation8 [shape = 's32[1]{0}', space=sflag, size = 0x4, scoped, tag = 'scoped memory for tpu_custom_call.1']
    #allocation9 [shape = 'u8[24576]{0}', space=vmem, size = 0x6000, scoped, tag = 'output window, operand 0']
    %11 = vsyncpa [#allocation5], 0
    %s12 = scalar_lea.sflag [#allocation5], 1
    %13 = vsyncpa %s12, 0
    %14 = vsyncpa [#allocation8], 0
    %15 = vsyncpa [#allocation6], 0
    %s16 = scalar_lea.sflag [#allocation6], 1
    %17 = vsyncpa %s16, 0
    loop: start=0, step=1, limit=4
    $region2: #{tpu_custom_call.1} parent=1 // loop_pre_header
      _
    $region3: #{tpu_custom_call.1} parent=1 // loop_header
      %s19 = sphi 0, %s23
      %p20 = scmp.ge.s32.totalorder %s19, 4
      %s29 = sphi 0, %s31
      %s32 = sphi 0, %s29
      %s33 = sphi 0, %s32
      %s49 = sphi 0, %s33
      %s53 = sphi 0, %s53
      %s55 = sphi 0, %s53
      %s56 = sphi 0, %s55
      %s70 = sphi 0, %s56
      %s74 = sphi 0, %s74
      %s76 = sphi 0, %s74
      %s77 = sphi 0, %s76
      %s91 = sphi 0, %s77
      %s95 = sphi 0, %s95
      %s97 = sphi 0, %s95
      %s98 = sphi 0, %s97
      %s112 = sphi 0, %s98
      %s116 = sphi 0, %s116
      %s118 = sphi 0, %s116
      %s119 = sphi 0, %s118
      %s133 = sphi 0, %s119
      %s137 = sphi 0, %s137
      %s139 = sphi 0, %s137
      %s140 = sphi 0, %s139
      %s154 = sphi 0, %s140
      %s160 = sphi 0, %s162
      %s163 = sphi 0, %s160
      %s164 = sphi 0, %s163
      %s180 = sphi 0, %s164
    $region4: #{tpu_custom_call.1} parent=1 // loop_header_branch
      %22 = sbr.rel (%p20) target = $region8
    $region5: #{tpu_custom_call.1} parent=1 // loop_body
      %s24 = ssub.s32 %s19, 1
      %s25 = ssub.s32 %s19, 2
      %s26 = sadd.s32 %s19, 1
      %s27 = ssub.s32 %s19, %s26
      %p28 = scmp.eq.s32.totalorder %s27, 0
      %s30 = sadd.s32 %s29, 1
      %s31 = scalar_select %p28, %s29, %s30
      %p34 = pneg %p28
      %p35 = scmp.eq.s32.totalorder %s19, 1
      %p36 = por %p34, %p35
      %p37 = scmp.ne.s32.totalorder %s29, %s32
      %p38 = scmp.eq.s32.totalorder %s19, 0
      %p39 = por %p37, %p38
      %p40 = scmp.ne.s32.totalorder %s29, %s32
      %p41 = scmp.eq.s32.totalorder %s24, 1
      %p42 = por %p40, %p41
      %p43 = scmp.ne.s32.totalorder %s32, %s33
      %p44 = scmp.eq.s32.totalorder %s24, 0
      %p45 = por %p43, %p44
      %p46 = scmp.ne.s32.totalorder %s32, %s33
      %p47 = scmp.eq.s32.totalorder %s25, 1
      %p48 = por %p46, %p47
      %p50 = scmp.ne.s32.totalorder %s33, %s49
      %p51 = scmp.eq.s32.totalorder %s25, 0
      %p52 = por %p50, %p51
      %s54 = sadd.s32 %s53, 1
      %p57 = scmp.eq.s32.totalorder %s19, 1
      %p58 = scmp.ne.s32.totalorder %s53, %s55
      %p59 = scmp.eq.s32.totalorder %s19, 0
      %p60 = por %p58, %p59
      %p61 = scmp.ne.s32.totalorder %s53, %s55
      %p62 = scmp.eq.s32.totalorder %s24, 1
      %p63 = por %p61, %p62
      %p64 = scmp.ne.s32.totalorder %s55, %s56
      %p65 = scmp.eq.s32.totalorder %s24, 0
      %p66 = por %p64, %p65
      %p67 = scmp.ne.s32.totalorder %s55, %s56
      %p68 = scmp.eq.s32.totalorder %s25, 1
      %p69 = por %p67, %p68
      %p71 = scmp.ne.s32.totalorder %s56, %s70
      %p72 = scmp.eq.s32.totalorder %s25, 0
      %p73 = por %p71, %p72
      %s75 = sadd.s32 %s74, 1
      %p78 = scmp.eq.s32.totalorder %s19, 1
      %p79 = scmp.ne.s32.totalorder %s74, %s76
      %p80 = scmp.eq.s32.totalorder %s19, 0
      %p81 = por %p79, %p80
      %p82 = scmp.ne.s32.totalorder %s74, %s76
      %p83 = scmp.eq.s32.totalorder %s24, 1
      %p84 = por %p82, %p83
      %p85 = scmp.ne.s32.totalorder %s76, %s77
      %p86 = scmp.eq.s32.totalorder %s24, 0
      %p87 = por %p85, %p86
      %p88 = scmp.ne.s32.totalorder %s76, %s77
      %p89 = scmp.eq.s32.totalorder %s25, 1
      %p90 = por %p88, %p89
      %p92 = scmp.ne.s32.totalorder %s77, %s91
      %p93 = scmp.eq.s32.totalorder %s25, 0
      %p94 = por %p92, %p93
      %s96 = sadd.s32 %s95, 1
      %p99 = scmp.eq.s32.totalorder %s19, 1
      %p100 = scmp.ne.s32.totalorder %s95, %s97
      %p101 = scmp.eq.s32.totalorder %s19, 0
      %p102 = por %p100, %p101
      %p103 = scmp.ne.s32.totalorder %s95, %s97
      %p104 = scmp.eq.s32.totalorder %s24, 1
      %p105 = por %p103, %p104
      %p106 = scmp.ne.s32.totalorder %s97, %s98
      %p107 = scmp.eq.s32.totalorder %s24, 0
      %p108 = por %p106, %p107
      %p109 = scmp.ne.s32.totalorder %s97, %s98
      %p110 = scmp.eq.s32.totalorder %s25, 1
      %p111 = por %p109, %p110
      %p113 = scmp.ne.s32.totalorder %s98, %s112
      %p114 = scmp.eq.s32.totalorder %s25, 0
      %p115 = por %p113, %p114
      %s117 = sadd.s32 %s116, 1
      %p120 = scmp.eq.s32.totalorder %s19, 1
      %p121 = scmp.ne.s32.totalorder %s116, %s118
      %p122 = scmp.eq.s32.totalorder %s19, 0
      %p123 = por %p121, %p122
      %p124 = scmp.ne.s32.totalorder %s116, %s118
      %p125 = scmp.eq.s32.totalorder %s24, 1
      %p126 = por %p124, %p125
      %p127 = scmp.ne.s32.totalorder %s118, %s119
      %p128 = scmp.eq.s32.totalorder %s24, 0
      %p129 = por %p127, %p128
      %p130 = scmp.ne.s32.totalorder %s118, %s119
      %p131 = scmp.eq.s32.totalorder %s25, 1
      %p132 = por %p130, %p131
      %p134 = scmp.ne.s32.totalorder %s119, %s133
      %p135 = scmp.eq.s32.totalorder %s25, 0
      %p136 = por %p134, %p135
      %s138 = sadd.s32 %s137, 1
      %p141 = scmp.eq.s32.totalorder %s19, 1
      %p142 = scmp.ne.s32.totalorder %s137, %s139
      %p143 = scmp.eq.s32.totalorder %s19, 0
      %p144 = por %p142, %p143
      %p145 = scmp.ne.s32.totalorder %s137, %s139
      %p146 = scmp.eq.s32.totalorder %s24, 1
      %p147 = por %p145, %p146
      %p148 = scmp.ne.s32.totalorder %s139, %s140
      %p149 = scmp.eq.s32.totalorder %s24, 0
      %p150 = por %p148, %p149
      %p151 = scmp.ne.s32.totalorder %s139, %s140
      %p152 = scmp.eq.s32.totalorder %s25, 1
      %p153 = por %p151, %p152
      %p155 = scmp.ne.s32.totalorder %s140, %s154
      %p156 = scmp.eq.s32.totalorder %s25, 0
      %p157 = por %p155, %p156
      %s158 = ssub.s32 %s19, %s26
      %p159 = scmp.eq.s32.totalorder %s158, 0
      %s161 = sadd.s32 %s160, 1
      %s162 = scalar_select %p159, %s160, %s161
      %p165 = pneg %p159
      %p166 = scmp.eq.s32.totalorder %s19, 1
      %p167 = por %p165, %p166
      %p168 = scmp.ne.s32.totalorder %s160, %s163
      %p169 = scmp.eq.s32.totalorder %s19, 0
      %p170 = por %p168, %p169
      %p171 = scmp.ne.s32.totalorder %s160, %s163
      %p172 = scmp.eq.s32.totalorder %s24, 1
      %p173 = por %p171, %p172
      %p174 = scmp.ne.s32.totalorder %s163, %s164
      %p175 = scmp.eq.s32.totalorder %s24, 0
      %p176 = por %p174, %p175
      %p177 = scmp.ne.s32.totalorder %s163, %s164
      %p178 = scmp.eq.s32.totalorder %s25, 1
      %p179 = por %p177, %p178
      %p181 = scmp.ne.s32.totalorder %s164, %s180
      %p182 = scmp.eq.s32.totalorder %s25, 0
      %p183 = por %p181, %p182
      %p184 = scmp.le.s32.totalorder 1, %s19
      %p185 = scmp.lt.s32.totalorder %s19, 3
      %p186 = pnand %p184, %p185
      %p187 = pneg %p186
      // Predicated region
      $region9: #{tpu_custom_call.1} parent=5 // pred_check
        _
      $region10: #{tpu_custom_call.1} parent=5 // pred_check_branch
        %189 = sbr.rel (%p186) target = $region12
      $region11: #{tpu_custom_call.1} parent=5 // pred_region
        %s190 = ssub.s32 %s19, 1
        // Predicated region
        $region13: #{tpu_custom_call.1} parent=11 // pred_check
          %p191 = pneg %p66
        $region14: #{tpu_custom_call.1} parent=11 // pred_check_branch
          %193 = sbr.rel (%p191) target = $region16
        $region15: #{tpu_custom_call.1} parent=11 // pred_region
          _
        $region16: #{tpu_custom_call.1} parent=11 // pred_fallthru
          _
        // Predicated region
        $region17: #{tpu_custom_call.1} parent=11 // pred_check
          %p194 = pneg %p87
        $region18: #{tpu_custom_call.1} parent=11 // pred_check_branch
          %196 = sbr.rel (%p194) target = $region20
        $region19: #{tpu_custom_call.1} parent=11 // pred_region
          _
        $region20: #{tpu_custom_call.1} parent=11 // pred_fallthru
          _
        // Predicated region
        $region21: #{tpu_custom_call.1} parent=11 // pred_check
          %p197 = pneg %p108
        $region22: #{tpu_custom_call.1} parent=11 // pred_check_branch
          %199 = sbr.rel (%p197) target = $region24
        $region23: #{tpu_custom_call.1} parent=11 // pred_region
          %201 = vsyncadd [#allocation8], 0
          %s202 = sshll.u32 %s3, 4
          %s203 = int_to_ptr.hbm [resolvable:$true] %s202
          %s204 = sshll.u32 [#allocation7], 4
          %s205 = int_to_ptr.vmem [resolvable:$true] %s204
          %210 = dma.hbm_to_vmem [thread:$0]  %s203, 192, %s205, [#allocation8], 64, 64, 4
        $region24: #{tpu_custom_call.1} parent=11 // pred_fallthru
          _
        // Predicated region
        $region25: #{tpu_custom_call.1} parent=11 // pred_check
          %p211 = pneg %p129
        $region26: #{tpu_custom_call.1} parent=11 // pred_check_branch
          %213 = sbr.rel (%p211) target = $region28
        $region27: #{tpu_custom_call.1} parent=11 // pred_region
          _
        $region28: #{tpu_custom_call.1} parent=11 // pred_fallthru
          _
        // Predicated region
        $region29: #{tpu_custom_call.1} parent=11 // pred_check
          %p214 = pneg %p150
        $region30: #{tpu_custom_call.1} parent=11 // pred_check_branch
          %216 = sbr.rel (%p214) target = $region32
        $region31: #{tpu_custom_call.1} parent=11 // pred_region
          _
        $region32: #{tpu_custom_call.1} parent=11 // pred_fallthru
          _
      $region12: #{tpu_custom_call.1} parent=5 // pred_fallthru
        _
      %p217 = scmp.lt.s32.totalorder %s19, 2
      // Predicated region
      $region33: #{tpu_custom_call.1} parent=5 // pred_check
        %p218 = pneg %p217
      $region34: #{tpu_custom_call.1} parent=5 // pred_check_branch
        %220 = sbr.rel (%p218) target = $region36
      $region35: #{tpu_custom_call.1} parent=5 // pred_region
        // Predicated region
        $region37: #{tpu_custom_call.1} parent=35 // pred_check
          %p221 = pneg %p39
        $region38: #{tpu_custom_call.1} parent=35 // pred_check_branch
          %223 = sbr.rel (%p221) target = $region40
        $region39: #{tpu_custom_call.1} parent=35 // pred_region
          %s224 = sand.u32 %s29, 1
          %s225 = scalar_lea.sflag [#allocation5], %s224
          %s226 = sand.u32 %s29, 1
          %s227 = smul.addr %s226, 16
          %s228 = scalar_lea.vmem [#allocation4], %s227
          %230 = vsyncadd %s225, 0
          %s231 = smul.addr %s19, 4
          %s232 = smul.addr %s231, 4
          %s233 = scalar_lea.hbm %s0, %s232
          %s235 = sshll.u32 %s233, 4
          %s236 = int_to_ptr.hbm [resolvable:$true] %s235
          %s237 = sshll.u32 %s228, 4
          %s238 = int_to_ptr.vmem [resolvable:$true] %s237
          %240 = dma.hbm_to_vmem [thread:$0]  %s236, 256, %s238, %s225
        $region40: #{tpu_custom_call.1} parent=35 // pred_fallthru
          _
      $region36: #{tpu_custom_call.1} parent=5 // pred_fallthru
        _
      %p241 = scmp.le.s32.totalorder 1, %s19
      %p242 = scmp.lt.s32.totalorder %s19, 3
      %p243 = pnand %p241, %p242
      %p244 = pneg %p243
      // Predicated region
      $region41: #{tpu_custom_call.1} parent=5 // pred_check
        _
      $region42: #{tpu_custom_call.1} parent=5 // pred_check_branch
        %246 = sbr.rel (%p243) target = $region44
      $region43: #{tpu_custom_call.1} parent=5 // pred_region
        %s247 = ssub.s32 %s19, 1
        %s248 = sand.u32 %s32, 1
        %s249 = scalar_lea.sflag [#allocation5], %s248
        %s250 = sand.u32 %s32, 1
        %s251 = smul.addr %s250, 16
        %s252 = scalar_lea.vmem [#allocation4], %s251
        // Predicated region
        $region45: #{tpu_custom_call.1} parent=43 // pred_check
          %p253 = pneg %p45
        $region46: #{tpu_custom_call.1} parent=43 // pred_check_branch
          %255 = sbr.rel (%p253) target = $region48
        $region47: #{tpu_custom_call.1} parent=43 // pred_region
          %257 = dma.done %s249, 256
        $region48: #{tpu_custom_call.1} parent=43 // pred_fallthru
          _
        // Predicated region
        $region49: #{tpu_custom_call.1} parent=43 // pred_check
          %p258 = pneg %p108
        $region50: #{tpu_custom_call.1} parent=43 // pred_check_branch
          %260 = sbr.rel (%p258) target = $region52
        $region51: #{tpu_custom_call.1} parent=43 // pred_region
          %262 = dma.done [#allocation8], 192
        $region52: #{tpu_custom_call.1} parent=43 // pred_fallthru
          _
        %s263 = sand.u32 %s32, 1
        %s264 = scalar_lea.sflag [#allocation5], %s263
        %s265 = sand.u32 %s32, 1
        %s266 = smul.addr %s265, 16
        %s267 = scalar_lea.vmem [#allocation4], %s266
        %p268 = pneg %p45
        %p269 = pneg %p42
        %p270 = pneg %p66
        %p271 = pneg %p63
        %p272 = pneg %p87
        %p273 = pneg %p84
        %p274 = pneg %p108
        %p275 = pneg %p105
        %p276 = pneg %p129
        %p277 = pneg %p126
        %p278 = pneg %p150
        %p279 = pneg %p147
        %p280 = pneg %p176
        %p281 = pneg %p173
        %s282 = sand.u32 %s163, 1
        %s283 = scalar_lea.sflag [#allocation6], %s282
        %s284 = sand.u32 %s163, 1
        %s285 = smul.addr %s284, 24
        %s286 = scalar_lea.vmem [#allocation9], %s285
        %v288 = vld [vmem:[%s252] sm:$0xff]
        %v289 = vld [vmem:[%s252 + $0x8] sm:$0xf]
        %290 = vst [vmem:[#allocation2] sm:$0xff] %v288
        %291 = vst [vmem:[#allocation2 + $0x8] sm:$0xf] %v289
        %v292 = vld [vmem:[%s252] sm:$0xff]
        %v293 = vld [vmem:[%s252 + $0x8] sm:$0xff]
        %296 = vrot.lane.b32.xlu0 %v292, 127
        %v297 = vpop.permute.xlu0 %296
        %298 = vrot.lane.b32.xlu0 %v293, 127
        %v299 = vpop.permute.xlu0 %298
        %v300 = vrot.slane %v297, 4
        %v301 = vrot.slane %v299, 4
        %vm302 = vcmask 1043456
        %v303 = vsel %vm302, %v300, %v301
        %vm304 = vcmask 1039360
        %v305 = vsel %vm304, %v297, %v303
        %v306 = vsel %vm304, %v299, %v301
        %309 = vst [vmem:[#allocation2 + $0xc] sm:$0xff] %v305
        %310 = vst [vmem:[#allocation2 + $0x14] sm:$0xf] %v306
        %v311 = vld [vmem:[%s252] sm:$0xff]
        %v312 = vld [vmem:[%s252 + $0x8] sm:$0xff]
        %315 = vrot.lane.b32.xlu0 %v311, 126
        %v316 = vpop.permute.xlu0 %315
        %317 = vrot.lane.b32.xlu0 %v312, 126
        %v318 = vpop.permute.xlu0 %317
        %v319 = vrot.slane %v316, 4
        %v320 = vrot.slane %v318, 4
        %v321 = vsel %vm302, %v319, %v320
        %vm322 = vcmask 1031168
        %v323 = vsel %vm322, %v316, %v321
        %v324 = vsel %vm322, %v318, %v320
        %327 = vst [vmem:[#allocation2 + $0x18] sm:$0xff] %v323
        %328 = vst [vmem:[#allocation2 + $0x20] sm:$0xf] %v324
        %v329 = vld [vmem:[%s1] sm:$0xf]
        %v330 = vld [vmem:[#allocation2] sm:$0xff]
        %v331 = vld [vmem:[#allocation2 + $0x8] sm:$0xf]
        %v332 = vld [vmem:[#allocation2 + $0xc] sm:$0xff]
        %v333 = vld [vmem:[#allocation2 + $0x14] sm:$0xf]
        %v334 = vld [vmem:[#allocation2 + $0x18] sm:$0xff]
        %v335 = vld [vmem:[#allocation2 + $0x20] sm:$0xf]
        %v336 = vld [vmem:[%s252] sm:$0xff]
        %v337 = vld [vmem:[%s252 + $0x8] sm:$0xff]
        %340 = vrot.lane.b32.xlu0 %v336, 110
        %v341 = vpop.permute.xlu0 %340
        %342 = vrot.lane.b32.xlu0 %v337, 110
        %v343 = vpop.permute.xlu0 %342
        %v344 = vrot.slane %v341, 4
        %v345 = vrot.slane %v343, 4
        %v346 = vsel %vm302, %v344, %v345
        %vm347 = vcmask 900096
        %v348 = vsel %vm347, %v341, %v346
        %v349 = vsel %vm347, %v343, %v345
        %s352 = scalar_lea.vmem [#allocation2], 36
        %353 = vst [vmem:[%s352] sm:$0xff] %v348
        %354 = vst [vmem:[%s352 + $0x8] sm:$0xf] %v349
        %v355 = vld [vmem:[%s252] sm:$0xff]
        %v356 = vld [vmem:[%s252 + $0x8] sm:$0xff]
        %359 = vrot.lane.b32.xlu0 %v355, 109
        %v360 = vpop.permute.xlu0 %359
        %361 = vrot.lane.b32.xlu0 %v356, 109
        %v362 = vpop.permute.xlu0 %361
        %v363 = vrot.slane %v360, 4
        %v364 = vrot.slane %v362, 4
        %v365 = vsel %vm302, %v363, %v364
        %vm366 = vcmask 891904
        %v367 = vsel %vm366, %v360, %v365
        %v368 = vsel %vm366, %v362, %v364
        %371 = vst [vmem:[%s352 + $0xc] sm:$0xff] %v367
        %372 = vst [vmem:[%s352 + $0x14] sm:$0xf] %v368
        %v373 = vld [vmem:[%s252] sm:$0xff]
        %v374 = vld [vmem:[%s252 + $0x8] sm:$0xff]
        %377 = vrot.lane.b32.xlu0 %v373, 108
        %v378 = vpop.permute.xlu0 %377
        %379 = vrot.lane.b32.xlu0 %v374, 108
        %v380 = vpop.permute.xlu0 %379
        %v381 = vrot.slane %v378, 4
        %v382 = vrot.slane %v380, 4
        %v383 = vsel %vm302, %v381, %v382
        %vm384 = vcmask 883712
        %v385 = vsel %vm384, %v378, %v383
        %v386 = vsel %vm384, %v380, %v382
        %389 = vst [vmem:[%s352 + $0x18] sm:$0xff] %v385
        %390 = vst [vmem:[%s352 + $0x20] sm:$0xf] %v386
        %s391 = scalar_lea.vmem %s1, 4
        %v392 = vld [vmem:[%s391] sm:$0xf]
        %v393 = vld [vmem:[%s352] sm:$0xff]
        %v394 = vld [vmem:[%s352 + $0x8] sm:$0xf]
        %v395 = vld [vmem:[%s352 + $0xc] sm:$0xff]
        %v396 = vld [vmem:[%s352 + $0x14] sm:$0xf]
        %v397 = vld [vmem:[%s352 + $0x18] sm:$0xff]
        %v398 = vld [vmem:[%s352 + $0x20] sm:$0xf]
        %v405 = vunpack.c.l.b16 %v393
        %v406 = vunpack.c.h.b16 %v393
        %v407 = vunpack.c.l.b16 %v394
        %v408 = vunpack.c.l.b16 %v395
        %v409 = vunpack.c.h.b16 %v395
        %v410 = vunpack.c.l.b16 %v396
        %v411 = vunpack.c.l.b16 %v397
        %v412 = vunpack.c.h.b16 %v397
        %v413 = vunpack.c.l.b16 %v398
        %v414 = vpack.c.b16 %v408, %v405
        %v415 = vpack.c.b16 %v409, %v406
        %v416 = vpack.c.b16 %v410, %v407
        %v417 = vpack.c.b16 %v411, %v411
        %v418 = vpack.c.b16 %v412, %v412
        %v419 = vpack.c.b16 %v413, %v413
        %vm423 = vcmask 195584
        %v425 = vsel %vm423, %v392, 0
        %vm427 = vcmask 1043456
        %v429 = vsel %vm427, %v417, 0
        %v432 = vsel %vm427, %v418, 0
        %v435 = vsel %vm427, %v419, 0
        %437 = vmatpush.bf16.msra.mxu0 0
        %438 = vmatpush.bf16.msra.mxu0 0
        %439 = vmatpush.bf16.msra.mxu0 0
        %440 = vmatpush.bf16.msra.mxu0 0
        %441 = vmatpush.bf16.msra.mxu0 0
        %442 = vmatpush.bf16.msra.mxu0 0
        %443 = vmatpush.bf16.msra.mxu0 %v429
        %444 = vmatpush.bf16.msra.mxu0 %v414
        %445 = vmatmul.bf16.gmra.mxu0 %v425
        %v446 = vpop.f32.mrf.mxu0
        %v447 = vadd.f32 0.0, %v446
        %v448 = vpop.f32.mrf.mxu0
        %449 = vdwg.mxu0
        %450 = vmatpush.bf16.msra.mxu0 0
        %451 = vmatpush.bf16.msra.mxu0 0
        %452 = vmatpush.bf16.msra.mxu0 0
        %453 = vmatpush.bf16.msra.mxu0 0
        %454 = vmatpush.bf16.msra.mxu0 0
        %455 = vmatpush.bf16.msra.mxu0 0
        %456 = vmatpush.bf16.msra.mxu0 %v432
        %457 = vmatpush.bf16.msra.mxu0 %v415
        %458 = vmatmul.bf16.gmra.mxu0 %v425
        %v459 = vpop.f32.mrf.mxu0
        %v460 = vadd.f32 0.0, %v459
        %v461 = vpop.f32.mrf.mxu0
        %462 = vdwg.mxu0
        %463 = vmatpush.bf16.msra.mxu0 0
        %464 = vmatpush.bf16.msra.mxu0 0
        %465 = vmatpush.bf16.msra.mxu0 0
        %466 = vmatpush.bf16.msra.mxu0 0
        %467 = vmatpush.bf16.msra.mxu0 0
        %468 = vmatpush.bf16.msra.mxu0 0
        %469 = vmatpush.bf16.msra.mxu0 %v435
        %470 = vmatpush.bf16.msra.mxu0 %v416
        %471 = vmatmul.bf16.gmra.mxu0 %v425
        %v472 = vpop.f32.mrf.mxu0
        %v473 = vadd.f32 0.0, %v472
        %v474 = vpop.f32.mrf.mxu0
        %475 = vdwg.mxu0
        %v482 = vunpack.c.l.b16 %v330
        %v483 = vunpack.c.h.b16 %v330
        %v484 = vunpack.c.l.b16 %v331
        %v485 = vunpack.c.l.b16 %v332
        %v486 = vunpack.c.h.b16 %v332
        %v487 = vunpack.c.l.b16 %v333
        %v488 = vunpack.c.l.b16 %v334
        %v489 = vunpack.c.h.b16 %v334
        %v490 = vunpack.c.l.b16 %v335
        %v491 = vpack.c.b16 %v485, %v482
        %v492 = vpack.c.b16 %v486, %v483
        %v493 = vpack.c.b16 %v487, %v484
        %v494 = vpack.c.b16 %v488, %v488
        %v495 = vpack.c.b16 %v489, %v489
        %v496 = vpack.c.b16 %v490, %v490
        %v501 = vsel %vm423, %v329, 0
        %v504 = vsel %vm427, %v494, 0
        %v507 = vsel %vm427, %v495, 0
        %v510 = vsel %vm427, %v496, 0
        %512 = vmatpush.bf16.msra.mxu0 0
        %513 = vmatpush.bf16.msra.mxu0 0
        %514 = vmatpush.bf16.msra.mxu0 0
        %515 = vmatpush.bf16.msra.mxu0 0
        %516 = vmatpush.bf16.msra.mxu0 0
        %517 = vmatpush.bf16.msra.mxu0 0
        %518 = vmatpush.bf16.msra.mxu0 %v504
        %519 = vmatpush.bf16.msra.mxu0 %v491
        %520 = vmatmul.bf16.gmra.mxu0 %v501
        %v521 = vpop.f32.mrf.mxu0
        %v522 = vadd.f32 %v447, %v521
        %v523 = vpop.f32.mrf.mxu0
        %524 = vdwg.mxu0
        %525 = vmatpush.bf16.msra.mxu0 0
        %526 = vmatpush.bf16.msra.mxu0 0
        %527 = vmatpush.bf16.msra.mxu0 0
        %528 = vmatpush.bf16.msra.mxu0 0
        %529 = vmatpush.bf16.msra.mxu0 0
        %530 = vmatpush.bf16.msra.mxu0 0
        %531 = vmatpush.bf16.msra.mxu0 %v507
        %532 = vmatpush.bf16.msra.mxu0 %v492
        %533 = vmatmul.bf16.gmra.mxu0 %v501
        %v534 = vpop.f32.mrf.mxu0
        %v535 = vadd.f32 %v460, %v534
        %v536 = vpop.f32.mrf.mxu0
        %537 = vdwg.mxu0
        %538 = vmatpush.bf16.msra.mxu0 0
        %539 = vmatpush.bf16.msra.mxu0 0
        %540 = vmatpush.bf16.msra.mxu0 0
        %541 = vmatpush.bf16.msra.mxu0 0
        %542 = vmatpush.bf16.msra.mxu0 0
        %543 = vmatpush.bf16.msra.mxu0 0
        %544 = vmatpush.bf16.msra.mxu0 %v510
        %545 = vmatpush.bf16.msra.mxu0 %v493
        %546 = vmatmul.bf16.gmra.mxu0 %v501
        %v547 = vpop.f32.mrf.mxu0
        %v548 = vadd.f32 %v473, %v547
        %v549 = vpop.f32.mrf.mxu0
        %550 = vdwg.mxu0
        %v551 = vld [vmem:[%s252] sm:$0xff]
        %v552 = vld [vmem:[%s252 + $0x8] sm:$0xff]
        %555 = vrot.lane.b32.xlu0 %v551, 92
        %v556 = vpop.permute.xlu0 %555
        %557 = vrot.lane.b32.xlu0 %v552, 92
        %v558 = vpop.permute.xlu0 %557
        %v559 = vrot.slane %v556, 4
        %v560 = vrot.slane %v558, 4
        %v561 = vsel %vm302, %v559, %v560
        %vm562 = vcmask 752640
        %v563 = vsel %vm562, %v556, %v561
        %v564 = vsel %vm562, %v558, %v560
        %567 = vst [vmem:[#allocation2] sm:$0xff] %v563
        %568 = vst [vmem:[#allocation2 + $0x8] sm:$0xf] %v564
        %v569 = vld [vmem:[%s252] sm:$0xff]
        %v570 = vld [vmem:[%s252 + $0x8] sm:$0xff]
        %573 = vrot.lane.b32.xlu0 %v569, 91
        %v574 = vpop.permute.xlu0 %573
        %575 = vrot.lane.b32.xlu0 %v570, 91
        %v576 = vpop.permute.xlu0 %575
        %v577 = vrot.slane %v574, 4
        %v578 = vrot.slane %v576, 4
        %v579 = vsel %vm302, %v577, %v578
        %vm580 = vcmask 744448
        %v581 = vsel %vm580, %v574, %v579
        %v582 = vsel %vm580, %v576, %v578
        %585 = vst [vmem:[#allocation2 + $0xc] sm:$0xff] %v581
        %586 = vst [vmem:[#allocation2 + $0x14] sm:$0xf] %v582
        %v587 = vld [vmem:[%s252] sm:$0xff]
        %v588 = vld [vmem:[%s252 + $0x8] sm:$0xff]
        %591 = vrot.lane.b32.xlu0 %v587, 90
        %v592 = vpop.permute.xlu0 %591
        %593 = vrot.lane.b32.xlu0 %v588, 90
        %v594 = vpop.permute.xlu0 %593
        %v595 = vrot.slane %v592, 4
        %v596 = vrot.slane %v594, 4
        %v597 = vsel %vm302, %v595, %v596
        %vm598 = vcmask 736256
        %v599 = vsel %vm598, %v592, %v597
        %v600 = vsel %vm598, %v594, %v596
        %603 = vst [vmem:[#allocation2 + $0x18] sm:$0xff] %v599
        %604 = vst [vmem:[#allocation2 + $0x20] sm:$0xf] %v600
        %s605 = scalar_lea.vmem %s1, 8
        %v606 = vld [vmem:[%s605] sm:$0xf]
        %v607 = vld [vmem:[#allocation2] sm:$0xff]
        %v608 = vld [vmem:[#allocation2 + $0x8] sm:$0xf]
        %v609 = vld [vmem:[#allocation2 + $0xc] sm:$0xff]
        %v610 = vld [vmem:[#allocation2 + $0x14] sm:$0xf]
        %v611 = vld [vmem:[#allocation2 + $0x18] sm:$0xff]
        %v612 = vld [vmem:[#allocation2 + $0x20] sm:$0xf]
        %v619 = vunpack.c.l.b16 %v607
        %v620 = vunpack.c.h.b16 %v607
        %v621 = vunpack.c.l.b16 %v608
        %v622 = vunpack.c.l.b16 %v609
        %v623 = vunpack.c.h.b16 %v609
        %v624 = vunpack.c.l.b16 %v610
        %v625 = vunpack.c.l.b16 %v611
        %v626 = vunpack.c.h.b16 %v611
        %v627 = vunpack.c.l.b16 %v612
        %v628 = vpack.c.b16 %v622, %v619
        %v629 = vpack.c.b16 %v623, %v620
        %v630 = vpack.c.b16 %v624, %v621
        %v631 = vpack.c.b16 %v625, %v625
        %v632 = vpack.c.b16 %v626, %v626
        %v633 = vpack.c.b16 %v627, %v627
        %v638 = vsel %vm423, %v606, 0
        %v641 = vsel %vm427, %v631, 0
        %v644 = vsel %vm427, %v632, 0
        %v647 = vsel %vm427, %v633, 0
        %649 = vmatpush.bf16.msra.mxu0 0
        %650 = vmatpush.bf16.msra.mxu0 0
        %651 = vmatpush.bf16.msra.mxu0 0
        %652 = vmatpush.bf16.msra.mxu0 0
        %653 = vmatpush.bf16.msra.mxu0 0
        %654 = vmatpush.bf16.msra.mxu0 0
        %655 = vmatpush.bf16.msra.mxu0 %v641
        %656 = vmatpush.bf16.msra.mxu0 %v628
        %657 = vmatmul.bf16.gmra.mxu0 %v638
        %v658 = vpop.f32.mrf.mxu0
        %v659 = vadd.f32 0.0, %v658
        %v660 = vpop.f32.mrf.mxu0
        %661 = vdwg.mxu0
        %662 = vmatpush.bf16.msra.mxu0 0
        %663 = vmatpush.bf16.msra.mxu0 0
        %664 = vmatpush.bf16.msra.mxu0 0
        %665 = vmatpush.bf16.msra.mxu0 0
        %666 = vmatpush.bf16.msra.mxu0 0
        %667 = vmatpush.bf16.msra.mxu0 0
        %668 = vmatpush.bf16.msra.mxu0 %v644
        %669 = vmatpush.bf16.msra.mxu0 %v629
        %670 = vmatmul.bf16.gmra.mxu0 %v638
        %v671 = vpop.f32.mrf.mxu0
        %v672 = vadd.f32 0.0, %v671
        %v673 = vpop.f32.mrf.mxu0
        %674 = vdwg.mxu0
        %675 = vmatpush.bf16.msra.mxu0 0
        %676 = vmatpush.bf16.msra.mxu0 0
        %677 = vmatpush.bf16.msra.mxu0 0
        %678 = vmatpush.bf16.msra.mxu0 0
        %679 = vmatpush.bf16.msra.mxu0 0
        %680 = vmatpush.bf16.msra.mxu0 0
        %681 = vmatpush.bf16.msra.mxu0 %v647
        %682 = vmatpush.bf16.msra.mxu0 %v630
        %683 = vmatmul.bf16.gmra.mxu0 %v638
        %v684 = vpop.f32.mrf.mxu0
        %v685 = vadd.f32 0.0, %v684
        %v686 = vpop.f32.mrf.mxu0
        %687 = vdwg.mxu0
        %v688 = vadd.f32 %v522, %v659
        %v689 = vadd.f32 %v535, %v672
        %v690 = vadd.f32 %v548, %v685
        %v691 = vld [vmem:[%s2] sm:$0xff]
        %693 = vset.pattern.permute.xlu0 0
        %694 = vperm.xlu0 %693, %v691
        %v695 = vpop.permute.xlu0 %694
        %v697 = vadd.f32 %v688, %v695
        %v698 = vadd.f32 %v689, %v695
        %v699 = vadd.f32 %v690, %v695
        %v700 = vmax.f32 %v697, 0.0
        %v701 = vmax.f32 %v698, 0.0
        %v702 = vmax.f32 %v699, 0.0
        %vm703 = vcmask 150528
        %704 = vst.msk [vmem:[#allocation3] sm:$0xf] %vm703, 0
        %vm705 = vcmask 1043608
        %706 = vst.msk [vmem:[#allocation3 + $0xc] sm:$0xf] %vm705, 0
        %v707 = vld [vmem:[%s5] sm:$0x7]
        %v709 = vperm.slane %v707, 0
        %v710 = vperm.slane %v707, 1
        %v711 = vperm.slane %v707, 2
        %v715 = vmul.f32 %v700, %v709
        %v716 = vmul.f32 %v701, %v710
        %v717 = vmul.f32 %v702, %v711
        %v718 = vpack.c.bf16 %v716, %v715
        %v719 = vpack.c.bf16 %v717, %v717
        %722 = vrot.lane.b32.xlu0 %v718, 19
        %v723 = vpop.permute.xlu0 %722
        %724 = vrot.lane.b32.xlu0 %v719, 19
        %v725 = vpop.permute.xlu0 %724
        %v726 = vrot.slane %v723, 4
        %v727 = vrot.slane %v725, 4
        %vm728 = vcmask 154624
        %v729 = vsel %vm728, %v726, %v723
        %v730 = vsel %vm302, %v726, %v727
        %v731 = vsel %vm728, %v730, %v725
        %vm734 = vcmask 1047556
        %vm735 = vmor %vm734, %vm705
        %736 = vst.msk [vmem:[#allocation3] sm:$0xff] %vm735, %v729
        %vm737 = vcmask 154628
        %vm738 = vmor %vm737, %vm427
        %739 = vst.msk [vmem:[#allocation3 + $0x8] sm:$0xff] %vm738, %v731
        %v740 = vld [vmem:[#allocation3] sm:$0xff]
        %v741 = vld [vmem:[#allocation3 + $0x8] sm:$0xf]
        %742 = vst [vmem:[#allocation2] sm:$0xff] %v740
        %743 = vst [vmem:[#allocation2 + $0x8] sm:$0xf] %v741
        %v744 = vld [vmem:[#allocation3] sm:$0xff]
        %v745 = vld [vmem:[#allocation3 + $0x8] sm:$0xff]
        %748 = vrot.lane.b32.xlu0 %v744, 127
        %v749 = vpop.permute.xlu0 %748
        %750 = vrot.lane.b32.xlu0 %v745, 127
        %v751 = vpop.permute.xlu0 %750
        %v752 = vrot.slane %v749, 4
        %v753 = vrot.slane %v751, 4
        %v754 = vsel %vm302, %v752, %v753
        %v755 = vsel %vm304, %v749, %v754
        %v756 = vsel %vm304, %v751, %v753
        %759 = vst [vmem:[#allocation2 + $0xc] sm:$0xff] %v755
        %760 = vst [vmem:[#allocation2 + $0x14] sm:$0xf] %v756
        %v761 = vld [vmem:[#allocation3] sm:$0xff]
        %v762 = vld [vmem:[#allocation3 + $0x8] sm:$0xff]
        %765 = vrot.lane.b32.xlu0 %v761, 126
        %v766 = vpop.permute.xlu0 %765
        %767 = vrot.lane.b32.xlu0 %v762, 126
        %v768 = vpop.permute.xlu0 %767
        %v769 = vrot.slane %v766, 4
        %v770 = vrot.slane %v768, 4
        %v771 = vsel %vm302, %v769, %v770
        %v772 = vsel %vm322, %v766, %v771
        %v773 = vsel %vm322, %v768, %v770
        %776 = vst [vmem:[#allocation2 + $0x18] sm:$0xff] %v772
        %777 = vst [vmem:[#allocation2 + $0x20] sm:$0xf] %v773
        %v778 = vld [vmem:[#allocation7] sm:$0xf]
        %v779 = vld [vmem:[#allocation2] sm:$0xff]
        %v780 = vld [vmem:[#allocation2 + $0x8] sm:$0xf]
        %v781 = vld [vmem:[#allocation2 + $0xc] sm:$0xff]
        %v782 = vld [vmem:[#allocation2 + $0x14] sm:$0xf]
        %v783 = vld [vmem:[#allocation2 + $0x18] sm:$0xff]
        %v784 = vld [vmem:[#allocation2 + $0x20] sm:$0xf]
        %v785 = vld [vmem:[#allocation3] sm:$0xff]
        %v786 = vld [vmem:[#allocation3 + $0x8] sm:$0xff]
        %789 = vrot.lane.b32.xlu0 %v785, 110
        %v790 = vpop.permute.xlu0 %789
        %791 = vrot.lane.b32.xlu0 %v786, 110
        %v792 = vpop.permute.xlu0 %791
        %v793 = vrot.slane %v790, 4
        %v794 = vrot.slane %v792, 4
        %v795 = vsel %vm302, %v793, %v794
        %v796 = vsel %vm347, %v790, %v795
        %v797 = vsel %vm347, %v792, %v794
        %800 = vst [vmem:[%s352] sm:$0xff] %v796
        %801 = vst [vmem:[%s352 + $0x8] sm:$0xf] %v797
        %v802 = vld [vmem:[#allocation3] sm:$0xff]
        %v803 = vld [vmem:[#allocation3 + $0x8] sm:$0xff]
        %806 = vrot.lane.b32.xlu0 %v802, 109
        %v807 = vpop.permute.xlu0 %806
        %808 = vrot.lane.b32.xlu0 %v803, 109
        %v809 = vpop.permute.xlu0 %808
        %v810 = vrot.slane %v807, 4
        %v811 = vrot.slane %v809, 4
        %v812 = vsel %vm302, %v810, %v811
        %v813 = vsel %vm366, %v807, %v812
        %v814 = vsel %vm366, %v809, %v811
        %817 = vst [vmem:[%s352 + $0xc] sm:$0xff] %v813
        %818 = vst [vmem:[%s352 + $0x14] sm:$0xf] %v814
        %v819 = vld [vmem:[#allocation3] sm:$0xff]
        %v820 = vld [vmem:[#allocation3 + $0x8] sm:$0xff]
        %823 = vrot.lane.b32.xlu0 %v819, 108
        %v824 = vpop.permute.xlu0 %823
        %825 = vrot.lane.b32.xlu0 %v820, 108
        %v826 = vpop.permute.xlu0 %825
        %v827 = vrot.slane %v824, 4
        %v828 = vrot.slane %v826, 4
        %v829 = vsel %vm302, %v827, %v828
        %v830 = vsel %vm384, %v824, %v829
        %v831 = vsel %vm384, %v826, %v828
        %834 = vst [vmem:[%s352 + $0x18] sm:$0xff] %v830
        %835 = vst [vmem:[%s352 + $0x20] sm:$0xf] %v831
        %s836 = scalar_lea.vmem [#allocation7], 4
        %v837 = vld [vmem:[%s836] sm:$0xf]
        %v838 = vld [vmem:[%s352] sm:$0xff]
        %v839 = vld [vmem:[%s352 + $0x8] sm:$0xf]
        %v840 = vld [vmem:[%s352 + $0xc] sm:$0xff]
        %v841 = vld [vmem:[%s352 + $0x14] sm:$0xf]
        %v842 = vld [vmem:[%s352 + $0x18] sm:$0xff]
        %v843 = vld [vmem:[%s352 + $0x20] sm:$0xf]
        %v850 = vunpack.c.l.b16 %v838
        %v851 = vunpack.c.h.b16 %v838
        %v852 = vunpack.c.l.b16 %v839
        %v853 = vunpack.c.l.b16 %v840
        %v854 = vunpack.c.h.b16 %v840
        %v855 = vunpack.c.l.b16 %v841
        %v856 = vunpack.c.l.b16 %v842
        %v857 = vunpack.c.h.b16 %v842
        %v858 = vunpack.c.l.b16 %v843
        %v859 = vpack.c.b16 %v853, %v850
        %v860 = vpack.c.b16 %v854, %v851
        %v861 = vpack.c.b16 %v855, %v852
        %v862 = vpack.c.b16 %v856, %v856
        %v863 = vpack.c.b16 %v857, %v857
        %v864 = vpack.c.b16 %v858, %v858
        %v869 = vsel %vm423, %v837, 0
        %v872 = vsel %vm427, %v862, 0
        %v875 = vsel %vm427, %v863, 0
        %v878 = vsel %vm427, %v864, 0
        %880 = vmatpush.bf16.msra.mxu0 0
        %881 = vmatpush.bf16.msra.mxu0 0
        %882 = vmatpush.bf16.msra.mxu0 0
        %883 = vmatpush.bf16.msra.mxu0 0
        %884 = vmatpush.bf16.msra.mxu0 0
        %885 = vmatpush.bf16.msra.mxu0 0
        %886 = vmatpush.bf16.msra.mxu0 %v872
        %887 = vmatpush.bf16.msra.mxu0 %v859
        %888 = vmatmul.bf16.gmra.mxu0 %v869
        %v889 = vpop.f32.mrf.mxu0
        %v890 = vadd.f32 0.0, %v889
        %v891 = vpop.f32.mrf.mxu0
        %892 = vdwg.mxu0
        %893 = vmatpush.bf16.msra.mxu0 0
        %894 = vmatpush.bf16.msra.mxu0 0
        %895 = vmatpush.bf16.msra.mxu0 0
        %896 = vmatpush.bf16.msra.mxu0 0
        %897 = vmatpush.bf16.msra.mxu0 0
        %898 = vmatpush.bf16.msra.mxu0 0
        %899 = vmatpush.bf16.msra.mxu0 %v875
        %900 = vmatpush.bf16.msra.mxu0 %v860
        %901 = vmatmul.bf16.gmra.mxu0 %v869
        %v902 = vpop.f32.mrf.mxu0
        %v903 = vadd.f32 0.0, %v902
        %v904 = vpop.f32.mrf.mxu0
        %905 = vdwg.mxu0
        %906 = vmatpush.bf16.msra.mxu0 0
        %907 = vmatpush.bf16.msra.mxu0 0
        %908 = vmatpush.bf16.msra.mxu0 0
        %909 = vmatpush.bf16.msra.mxu0 0
        %910 = vmatpush.bf16.msra.mxu0 0
        %911 = vmatpush.bf16.msra.mxu0 0
        %912 = vmatpush.bf16.msra.mxu0 %v878
        %913 = vmatpush.bf16.msra.mxu0 %v861
        %914 = vmatmul.bf16.gmra.mxu0 %v869
        %v915 = vpop.f32.mrf.mxu0
        %v916 = vadd.f32 0.0, %v915
        %v917 = vpop.f32.mrf.mxu0
        %918 = vdwg.mxu0
        %v925 = vunpack.c.l.b16 %v779
        %v926 = vunpack.c.h.b16 %v779
        %v927 = vunpack.c.l.b16 %v780
        %v928 = vunpack.c.l.b16 %v781
        %v929 = vunpack.c.h.b16 %v781
        %v930 = vunpack.c.l.b16 %v782
        %v931 = vunpack.c.l.b16 %v783
        %v932 = vunpack.c.h.b16 %v783
        %v933 = vunpack.c.l.b16 %v784
        %v934 = vpack.c.b16 %v928, %v925
        %v935 = vpack.c.b16 %v929, %v926
        %v936 = vpack.c.b16 %v930, %v927
        %v937 = vpack.c.b16 %v931, %v931
        %v938 = vpack.c.b16 %v932, %v932
        %v939 = vpack.c.b16 %v933, %v933
        %v944 = vsel %vm423, %v778, 0
        %v947 = vsel %vm427, %v937, 0
        %v950 = vsel %vm427, %v938, 0
        %v953 = vsel %vm427, %v939, 0
        %955 = vmatpush.bf16.msra.mxu0 0
        %956 = vmatpush.bf16.msra.mxu0 0
        %957 = vmatpush.bf16.msra.mxu0 0
        %958 = vmatpush.bf16.msra.mxu0 0
        %959 = vmatpush.bf16.msra.mxu0 0
        %960 = vmatpush.bf16.msra.mxu0 0
        %961 = vmatpush.bf16.msra.mxu0 %v947
        %962 = vmatpush.bf16.msra.mxu0 %v934
        %963 = vmatmul.bf16.gmra.mxu0 %v944
        %v964 = vpop.f32.mrf.mxu0
        %v965 = vadd.f32 %v890, %v964
        %v966 = vpop.f32.mrf.mxu0
        %967 = vdwg.mxu0
        %968 = vmatpush.bf16.msra.mxu0 0
        %969 = vmatpush.bf16.msra.mxu0 0
        %970 = vmatpush.bf16.msra.mxu0 0
        %971 = vmatpush.bf16.msra.mxu0 0
        %972 = vmatpush.bf16.msra.mxu0 0
        %973 = vmatpush.bf16.msra.mxu0 0
        %974 = vmatpush.bf16.msra.mxu0 %v950
        %975 = vmatpush.bf16.msra.mxu0 %v935
        %976 = vmatmul.bf16.gmra.mxu0 %v944
        %v977 = vpop.f32.mrf.mxu0
        %v978 = vadd.f32 %v903, %v977
        %v979 = vpop.f32.mrf.mxu0
        %980 = vdwg.mxu0
        %981 = vmatpush.bf16.msra.mxu0 0
        %982 = vmatpush.bf16.msra.mxu0 0
        %983 = vmatpush.bf16.msra.mxu0 0
        %984 = vmatpush.bf16.msra.mxu0 0
        %985 = vmatpush.bf16.msra.mxu0 0
        %986 = vmatpush.bf16.msra.mxu0 0
        %987 = vmatpush.bf16.msra.mxu0 %v953
        %988 = vmatpush.bf16.msra.mxu0 %v936
        %989 = vmatmul.bf16.gmra.mxu0 %v944
        %v990 = vpop.f32.mrf.mxu0
        %v991 = vadd.f32 %v916, %v990
        %v992 = vpop.f32.mrf.mxu0
        %993 = vdwg.mxu0
        %v994 = vld [vmem:[#allocation3] sm:$0xff]
        %v995 = vld [vmem:[#allocation3 + $0x8] sm:$0xff]
        %998 = vrot.lane.b32.xlu0 %v994, 92
        %v999 = vpop.permute.xlu0 %998
        %1000 = vrot.lane.b32.xlu0 %v995, 92
        %v1001 = vpop.permute.xlu0 %1000
        %v1002 = vrot.slane %v999, 4
        %v1003 = vrot.slane %v1001, 4
        %v1004 = vsel %vm302, %v1002, %v1003
        %v1005 = vsel %vm562, %v999, %v1004
        %v1006 = vsel %vm562, %v1001, %v1003
        %1009 = vst [vmem:[#allocation2] sm:$0xff] %v1005
        %1010 = vst [vmem:[#allocation2 + $0x8] sm:$0xf] %v1006
        %v1011 = vld [vmem:[#allocation3] sm:$0xff]
        %v1012 = vld [vmem:[#allocation3 + $0x8] sm:$0xff]
        %1015 = vrot.lane.b32.xlu0 %v1011, 91
        %v1016 = vpop.permute.xlu0 %1015
        %1017 = vrot.lane.b32.xlu0 %v1012, 91
        %v1018 = vpop.permute.xlu0 %1017
        %v1019 = vrot.slane %v1016, 4
        %v1020 = vrot.slane %v1018, 4
        %v1021 = vsel %vm302, %v1019, %v1020
        %v1022 = vsel %vm580, %v1016, %v1021
        %v1023 = vsel %vm580, %v1018, %v1020
        %1026 = vst [vmem:[#allocation2 + $0xc] sm:$0xff] %v1022
        %1027 = vst [vmem:[#allocation2 + $0x14] sm:$0xf] %v1023
        %v1028 = vld [vmem:[#allocation3] sm:$0xff]
        %v1029 = vld [vmem:[#allocation3 + $0x8] sm:$0xff]
        %1032 = vrot.lane.b32.xlu0 %v1028, 90
        %v1033 = vpop.permute.xlu0 %1032
        %1034 = vrot.lane.b32.xlu0 %v1029, 90
        %v1035 = vpop.permute.xlu0 %1034
        %v1036 = vrot.slane %v1033, 4
        %v1037 = vrot.slane %v1035, 4
        %v1038 = vsel %vm302, %v1036, %v1037
        %v1039 = vsel %vm598, %v1033, %v1038
        %v1040 = vsel %vm598, %v1035, %v1037
        %1043 = vst [vmem:[#allocation2 + $0x18] sm:$0xff] %v1039
        %1044 = vst [vmem:[#allocation2 + $0x20] sm:$0xf] %v1040
        %s1045 = scalar_lea.vmem [#allocation7], 8
        %v1046 = vld [vmem:[%s1045] sm:$0xf]
        %v1047 = vld [vmem:[#allocation2] sm:$0xff]
        %v1048 = vld [vmem:[#allocation2 + $0x8] sm:$0xf]
        %v1049 = vld [vmem:[#allocation2 + $0xc] sm:$0xff]
        %v1050 = vld [vmem:[#allocation2 + $0x14] sm:$0xf]
        %v1051 = vld [vmem:[#allocation2 + $0x18] sm:$0xff]
        %v1052 = vld [vmem:[#allocation2 + $0x20] sm:$0xf]
        %v1059 = vunpack.c.l.b16 %v1047
        %v1060 = vunpack.c.h.b16 %v1047
        %v1061 = vunpack.c.l.b16 %v1048
        %v1062 = vunpack.c.l.b16 %v1049
        %v1063 = vunpack.c.h.b16 %v1049
        %v1064 = vunpack.c.l.b16 %v1050
        %v1065 = vunpack.c.l.b16 %v1051
        %v1066 = vunpack.c.h.b16 %v1051
        %v1067 = vunpack.c.l.b16 %v1052
        %v1068 = vpack.c.b16 %v1062, %v1059
        %v1069 = vpack.c.b16 %v1063, %v1060
        %v1070 = vpack.c.b16 %v1064, %v1061
        %v1071 = vpack.c.b16 %v1065, %v1065
        %v1072 = vpack.c.b16 %v1066, %v1066
        %v1073 = vpack.c.b16 %v1067, %v1067
        %v1078 = vsel %vm423, %v1046, 0
        %v1081 = vsel %vm427, %v1071, 0
        %v1084 = vsel %vm427, %v1072, 0
        %v1087 = vsel %vm427, %v1073, 0
        %1089 = vmatpush.bf16.msra.mxu0 0
        %1090 = vmatpush.bf16.msra.mxu0 0
        %1091 = vmatpush.bf16.msra.mxu0 0
        %1092 = vmatpush.bf16.msra.mxu0 0
        %1093 = vmatpush.bf16.msra.mxu0 0
        %1094 = vmatpush.bf16.msra.mxu0 0
        %1095 = vmatpush.bf16.msra.mxu0 %v1081
        %1096 = vmatpush.bf16.msra.mxu0 %v1068
        %1097 = vmatmul.bf16.gmra.mxu0 %v1078
        %v1098 = vpop.f32.mrf.mxu0
        %v1099 = vadd.f32 0.0, %v1098
        %v1100 = vpop.f32.mrf.mxu0
        %1101 = vdwg.mxu0
        %1102 = vmatpush.bf16.msra.mxu0 0
        %1103 = vmatpush.bf16.msra.mxu0 0
        %1104 = vmatpush.bf16.msra.mxu0 0
        %1105 = vmatpush.bf16.msra.mxu0 0
        %1106 = vmatpush.bf16.msra.mxu0 0
        %1107 = vmatpush.bf16.msra.mxu0 0
        %1108 = vmatpush.bf16.msra.mxu0 %v1084
        %1109 = vmatpush.bf16.msra.mxu0 %v1069
        %1110 = vmatmul.bf16.gmra.mxu0 %v1078
        %v1111 = vpop.f32.mrf.mxu0
        %v1112 = vadd.f32 0.0, %v1111
        %v1113 = vpop.f32.mrf.mxu0
        %1114 = vdwg.mxu0
        %1115 = vmatpush.bf16.msra.mxu0 0
        %1116 = vmatpush.bf16.msra.mxu0 0
        %1117 = vmatpush.bf16.msra.mxu0 0
        %1118 = vmatpush.bf16.msra.mxu0 0
        %1119 = vmatpush.bf16.msra.mxu0 0
        %1120 = vmatpush.bf16.msra.mxu0 0
        %1121 = vmatpush.bf16.msra.mxu0 %v1087
        %1122 = vmatpush.bf16.msra.mxu0 %v1070
        %1123 = vmatmul.bf16.gmra.mxu0 %v1078
        %v1124 = vpop.f32.mrf.mxu0
        %v1125 = vadd.f32 0.0, %v1124
        %v1126 = vpop.f32.mrf.mxu0
        %1127 = vdwg.mxu0
        %v1128 = vadd.f32 %v965, %v1099
        %v1129 = vadd.f32 %v978, %v1112
        %v1130 = vadd.f32 %v991, %v1125
        %v1131 = vld [vmem:[%s4] sm:$0xff]
        %1133 = vset.pattern.permute.xlu0 0
        %1134 = vperm.xlu0 %1133, %v1131
        %v1135 = vpop.permute.xlu0 %1134
        %v1137 = vadd.f32 %v1128, %v1135
        %v1138 = vadd.f32 %v1129, %v1135
        %v1139 = vadd.f32 %v1130, %v1135
        %v1140 = vmax.f32 %v1137, 0.0
        %v1141 = vmax.f32 %v1138, 0.0
        %v1142 = vmax.f32 %v1139, 0.0
        %1143 = vst [vmem:[%s286] sm:$0xff] %v1140
        %1144 = vst [vmem:[%s286 + $0x8] sm:$0xff] %v1141
        %1145 = vst [vmem:[%s286 + $0x10] sm:$0xff] %v1142
        %s1146 = sand.u32 %s163, 1
        %s1147 = scalar_lea.sflag [#allocation6], %s1146
        %s1148 = sand.u32 %s163, 1
        %s1149 = smul.addr %s1148, 24
        %s1150 = scalar_lea.vmem [#allocation9], %s1149
        // Predicated region
        $region53: #{tpu_custom_call.1} parent=43 // pred_check
          %p1151 = pneg %p173
        $region54: #{tpu_custom_call.1} parent=43 // pred_check_branch
          %1153 = sbr.rel (%p1151) target = $region56
        $region55: #{tpu_custom_call.1} parent=43 // pred_region
          %1155 = vsyncadd %s1147, 0
          %s1156 = smul.addr %s24, 3
          %s1157 = smul.addr %s1156, 8
          %s1158 = scalar_lea.hbm %s6, %s1157
          %s1160 = sshll.u32 %s1150, 4
          %s1161 = int_to_ptr.vmem [resolvable:$true] %s1160
          %s1162 = sshll.u32 %s1158, 4
          %s1163 = int_to_ptr.hbm [resolvable:$true] %s1162
          %1165 = dma.vmem_to_hbm [thread:$0]  %s1161, 384, %s1163, %s1147
        $region56: #{tpu_custom_call.1} parent=43 // pred_fallthru
          _
      $region44: #{tpu_custom_call.1} parent=5 // pred_fallthru
        _
      %p1166 = scmp.le.s32.totalorder 2, %s19
      // Predicated region
      $region57: #{tpu_custom_call.1} parent=5 // pred_check
        %p1167 = pneg %p1166
      $region58: #{tpu_custom_call.1} parent=5 // pred_check_branch
        %1169 = sbr.rel (%p1167) target = $region60
      $region59: #{tpu_custom_call.1} parent=5 // pred_region
        %s1170 = ssub.s32 %s19, 2
        // Predicated region
        $region61: #{tpu_custom_call.1} parent=59 // pred_check
          %p1171 = pneg %p179
        $region62: #{tpu_custom_call.1} parent=59 // pred_check_branch
          %1173 = sbr.rel (%p1171) target = $region64
        $region63: #{tpu_custom_call.1} parent=59 // pred_region
          %s1174 = sand.u32 %s164, 1
          %s1175 = scalar_lea.sflag [#allocation6], %s1174
          %s1176 = sand.u32 %s164, 1
          %s1177 = smul.addr %s1176, 24
          %s1178 = scalar_lea.vmem [#allocation9], %s1177
          %1180 = dma.done %s1175, 384
        $region64: #{tpu_custom_call.1} parent=59 // pred_fallthru
          _
      $region60: #{tpu_custom_call.1} parent=5 // pred_fallthru
        _
    $region6: #{tpu_custom_call.1} parent=1 // loop_footer
      %s23 = sadd.s32 1, %s19
    $region7: #{tpu_custom_call.1} parent=1 // loop_footer_branch
      %18 = sbr.rel target = $region3
    $region8: #{tpu_custom_call.1} parent=1 // loop_exit
      _
    %1181 = vsyncpa [#allocation5], 1
    %s1182 = scalar_lea.sflag [#allocation5], 1
    %1183 = vsyncpa %s1182, 1
    %1184 = vsyncpa [#allocation8], 1
    %1185 = vsyncpa [#allocation6], 1
    %s1186 = scalar_lea.sflag [#allocation6], 1
    %1187 = vsyncpa %s1186, 1

</llo_original>
